<compile_context>
chip_gen: v7x
topology: tpu7x:2x2x1
jax: 0.10.0
libtpu: 0.0.40
codegen_flags: <defaults>
</compile_context>

<pallas_src>
import jax
import jax.numpy as jnp
from jax.experimental import pallas as pl
from jax.experimental.pallas import tpu as pltpu

_LANES = 128


# ----------------------------------------------------------------------------
# Pallas kernel: whole teacher-forced decode in one invocation.
# ----------------------------------------------------------------------------
def _decoder_kernel(
    tokens_ref,   # VMEM (T*B, 1)  int32  decoder input tokens, t-major
    ew_ref,       # VMEM (V, 4H)   f32    embedding @ W_ih^T (padding row 3 = 0)
    h0_ref,       # VMEM (B, H)    f32    encoder hidden (initial LSTM h)
    whh_ref,      # VMEM (H, 4H)   f32    W_hh^T
    b_ref,        # VMEM (1, 4H)   f32    b_ih + b_hh
    wfc_ref,      # VMEM (H, Vp)   f32    W_fc^T zero-padded to Vp lanes
    bfc_ref,      # VMEM (1, Vp)   f32    b_fc zero-padded
    logits_ref,   # VMEM (T*B, Vp) f32    all logits, t-major (single writeback)
    hfin_ref,     # VMEM (B, H)    f32    final hidden (single writeback)
    gx_ref,       # VMEM scratch (T*B, 4H) f32  hoisted input-path gates
    hs_ref,       # VMEM scratch (T*B, H)  f32  per-step hidden states
):
    TB = tokens_ref.shape[0]
    V = ew_ref.shape[0]
    B, H = h0_ref.shape
    T = TB // B

    # --- Hoisted off the recurrence: one-hot(tokens) @ (embedding @ W_ih^T) + bias.
    tok = tokens_ref[...]                                      # (T*B, 1) int32
    iota = jax.lax.broadcasted_iota(jnp.int32, (TB, V), 1)
    one_hot = (iota == tok).astype(jnp.float32)                # (T*B, V)
    gx_ref[...] = (
        jnp.dot(one_hot, ew_ref[...], preferred_element_type=jnp.float32)
        + b_ref[...]
    )                                                          # (T*B, 4H)

    # --- Serial LSTM recurrence (fully unrolled). One h @ W_hh^T matmul per step.
    whh = whh_ref[...]
    h = h0_ref[...]
    c = jnp.zeros_like(h)
    for t in range(T):
        gates = gx_ref[pl.ds(t * B, B), :] + jnp.dot(
            h, whh, preferred_element_type=jnp.float32
        )                                                      # (B, 4H)
        # Full-width transcendentals on the 4H=128-lane gate vreg (EUP), slice after.
        sig = jax.nn.sigmoid(gates)
        th = jnp.tanh(gates)
        i_g = sig[:, 0:H]            # PyTorch LSTM gate order: i, f, g, o
        f_g = sig[:, H:2 * H]
        g_g = th[:, 2 * H:3 * H]
        o_g = sig[:, 3 * H:4 * H]
        c = f_g * c + i_g * g_g
        h = o_g * jnp.tanh(c)
        hs_ref[pl.ds(t * B, B), :] = h

    # --- Batched, lane-dense output projection: one (T*B,H)x(H,Vp) matmul.
    logits_ref[...] = (
        jnp.dot(hs_ref[...], wfc_ref[...], preferred_element_type=jnp.float32)
        + bfc_ref[...]
    )
    hfin_ref[...] = h


# ----------------------------------------------------------------------------
# One-time (parameter-load-time) preparation
# ----------------------------------------------------------------------------
def prepare_decoder_params(params):
    V, H = params["embedding"].shape
    Vp = ((V + _LANES - 1) // _LANES) * _LANES
    emb = params["embedding"].astype(jnp.float32)
    w_ih_t = params["w_ih"].T.astype(jnp.float32)              # (H, 4H)
    wfc_t = params["w_fc"].T.astype(jnp.float32)               # (H, V)
    return {
        "ew": emb @ w_ih_t,                                    # (V, 4H)
        "whh_t": params["w_hh"].T.astype(jnp.float32),         # (H, 4H)
        "bias": (params["b_ih"] + params["b_hh"])
        .reshape(1, 4 * H).astype(jnp.float32),
        "wfc_pad": jnp.zeros((H, Vp), jnp.float32).at[:, :V].set(wfc_t),
        "bfc_pad": jnp.zeros((1, Vp), jnp.float32)
        .at[:, :V].set(params["b_fc"].astype(jnp.float32)[None, :]),
    }


# ----------------------------------------------------------------------------
# Jitted wrapper (token prep + pallas_call + reshape fused into one dispatch)
# ----------------------------------------------------------------------------
@jax.jit
def step_selector_decoder_forward(prepped, encoder_out, encoder_hidden, target):
    """Teacher-forced forward pass.

    encoder_out:    (B, S, H)  -- only its shape is used (max_seq_len = S - 1)
    encoder_hidden: (1, B, H)
    target:         (B, L) int, L >= S - 2

    Returns (decoder_outputs, decoder_hidden, None) with
      decoder_outputs: (T, B, 1, V) float32,  T = S - 1
      decoder_hidden:  (1, B, H)    float32
    """
    B, S, _ = encoder_out.shape
    T = S - 1
    V = prepped["ew"].shape[0]
    H = prepped["whh_t"].shape[0]
    Vp = prepped["wfc_pad"].shape[1]

    # Decoder inputs per step: SOS token (=0), then teacher-forced target[:, :T-1].
    tokens = jnp.concatenate(
        [jnp.zeros((B, 1), jnp.int32), target[:, : T - 1].astype(jnp.int32)],
        axis=1,
    ).T.reshape(T * B, 1)                                      # t-major flat

    h0 = encoder_hidden[0].astype(jnp.float32)                 # (B, H)

    logits_pad, h_final = pl.pallas_call(
        _decoder_kernel,
        out_shape=(
            jax.ShapeDtypeStruct((T * B, Vp), jnp.float32),
            jax.ShapeDtypeStruct((B, H), jnp.float32),
        ),
        grid=(1,),
        in_specs=[
            pl.BlockSpec((T * B, 1), lambda i: (0, 0)),
            pl.BlockSpec((V, 4 * H), lambda i: (0, 0)),
            pl.BlockSpec((B, H), lambda i: (0, 0)),
            pl.BlockSpec((H, 4 * H), lambda i: (0, 0)),
            pl.BlockSpec((1, 4 * H), lambda i: (0, 0)),
            pl.BlockSpec((H, Vp), lambda i: (0, 0)),
            pl.BlockSpec((1, Vp), lambda i: (0, 0)),
        ],
        out_specs=(
            pl.BlockSpec((T * B, Vp), lambda i: (0, 0)),
            pl.BlockSpec((B, H), lambda i: (0, 0)),
        ),
        scratch_shapes=[
            pltpu.VMEM((T * B, 4 * H), jnp.float32),
            pltpu.VMEM((T * B, H), jnp.float32),
        ],
        compiler_params=pltpu.CompilerParams(dimension_semantics=("arbitrary",)),
    )(tokens, prepped["ew"], h0, prepped["whh_t"], prepped["bias"],
      prepped["wfc_pad"], prepped["bfc_pad"])

    # torch.stack of per-step (B, 1, V) tensors -> (T, B, 1, V)
    decoder_outputs = logits_pad[:, :V].reshape(T, B, 1, V)
    decoder_hidden = h_final.reshape(1, B, H)
    return decoder_outputs, decoder_hidden, None


# ----------------------------------------------------------------------------
# Pure-JAX reference (for numerical validation)
# ----------------------------------------------------------------------------
def _reference(params, encoder_hidden, tokens):
    T, B = tokens.shape
    H = params["w_hh"].shape[1]
    E = params["embedding"]
    wih_t, whh_t = params["w_ih"].T, params["w_hh"].T
    bias = params["b_ih"] + params["b_hh"]
    wfc_t, bfc = params["w_fc"].T, params["b_fc"]
    h = encoder_hidden[0]
    c = jnp.zeros_like(h)
    outs = []
    for t in range(T):
        x = E[tokens[t]]
        gates = x @ wih_t + h @ whh_t + bias
        i_g = jax.nn.sigmoid(gates[:, :H])
        f_g = jax.nn.sigmoid(gates[:, H:2 * H])
        g_g = jnp.tanh(gates[:, 2 * H:3 * H])
        o_g = jax.nn.sigmoid(gates[:, 3 * H:])
        c = f_g * c + i_g * g_g
        h = o_g * jnp.tanh(c)
        outs.append(h @ wfc_t + bfc)
    return jnp.stack(outs), h


# ----------------------------------------------------------------------------
# Deterministic parameter init (mimicking nn.Embedding / nn.LSTM / nn.Linear)
# ----------------------------------------------------------------------------
def init_params(key, output_size, hidden_size):
    V, H = output_size, hidden_size
    ks = jax.random.split(key, 7)
    bound = 1.0 / jnp.sqrt(H)
    emb = jax.random.normal(ks[0], (V, H), jnp.float32)
    emb = emb.at[3].set(0.0)  # padding_idx=3 -> zero row
    return {
        "embedding": emb,
        "w_ih": jax.random.uniform(ks[1], (4 * H, H), jnp.float32, -bound, bound),
        "w_hh": jax.random.uniform(ks[2], (4 * H, H), jnp.float32, -bound, bound),
        "b_ih": jax.random.uniform(ks[3], (4 * H,), jnp.float32, -bound, bound),
        "b_hh": jax.random.uniform(ks[4], (4 * H,), jnp.float32, -bound, bound),
        "w_fc": jax.random.uniform(ks[5], (V, H), jnp.float32, -bound, bound),
        "b_fc": jax.random.uniform(ks[6], (V,), jnp.float32, -bound, bound),
    }


if __name__ == "__main__":
    # TODO(synk): inference branch (target=None, greedy argmax feedback) not
    # implemented; only the teacher-forcing path of forward() is covered.
    B, H, V, S = 2, 32, 16, 9          # max_seq_len T = S - 1 = 8
    T = S - 1

    key = jax.random.PRNGKey(0)
    k_par, k_eo, k_eh, k_tg = jax.random.split(key, 4)
    params = init_params(k_par, V, H)
    prepped = prepare_decoder_params(params)

    encoder_out = jax.random.normal(k_eo, (B, S, H), jnp.float32)
    encoder_hidden = jax.random.normal(k_eh, (1, B, H), jnp.float32)
    target = jax.random.randint(k_tg, (B, T), 0, V, jnp.int32)

    dec_out, dec_hidden, dec_none = step_selector_decoder_forward(
        prepped, encoder_out, encoder_hidden, target
    )
    dec_out = jax.block_until_ready(dec_out)
    dec_hidden = jax.block_until_ready(dec_hidden)

    assert dec_out.shape == (T, B, 1, V), dec_out.shape
    assert dec_hidden.shape == (1, B, H), dec_hidden.shape
    assert dec_none is None

    # Validate against pure-JAX reference.
    tokens = jnp.concatenate(
        [jnp.zeros((B, 1), jnp.int32), target[:, : T - 1]], axis=1
    ).T
    ref_out, ref_h = _reference(params, encoder_hidden, tokens)
    assert jnp.allclose(dec_out.reshape(T, B, V), ref_out, atol=1e-2, rtol=1e-2), (
        float(jnp.max(jnp.abs(dec_out.reshape(T, B, V) - ref_out)))
    )
    assert jnp.allclose(dec_hidden[0], ref_h, atol=1e-2, rtol=1e-2), (
        float(jnp.max(jnp.abs(dec_hidden[0] - ref_h)))
    )

    print("KERNEL_OK")
</pallas_src>

<mosaic_0001>
module attributes {stable_mosaic.version = 11 : i64} {
  func.func @_decoder_kernel(%arg0: i32, %arg1: memref<16x1xi32, #tpu.memory_space<vmem>>, %arg2: memref<16x128xf32, #tpu.memory_space<vmem>>, %arg3: memref<2x32xf32, #tpu.memory_space<vmem>>, %arg4: memref<32x128xf32, #tpu.memory_space<vmem>>, %arg5: memref<1x128xf32, #tpu.memory_space<vmem>>, %arg6: memref<32x128xf32, #tpu.memory_space<vmem>>, %arg7: memref<1x128xf32, #tpu.memory_space<vmem>>, %arg8: memref<16x128xf32, #tpu.memory_space<vmem>>, %arg9: memref<2x32xf32, #tpu.memory_space<vmem>>, %arg10: memref<16x128xf32, #tpu.memory_space<vmem>>, %arg11: memref<16x32xf32, #tpu.memory_space<vmem>>) attributes {dimension_semantics = [#tpu.dimension_semantics<arbitrary>], iteration_bounds = array<i64: 1>, scalar_prefetch = 0 : i64, scratch_operands = 2 : i64, tpu.core_type = #tpu.core_type<tc>, window_params = [{pipeline_mode = #tpu.pipeline_mode<synchronous>, transform_indices = @transform_0, window_bounds = array<i64: 16, 1>}, {pipeline_mode = #tpu.pipeline_mode<synchronous>, transform_indices = @transform_1, window_bounds = array<i64: 16, 128>}, {pipeline_mode = #tpu.pipeline_mode<synchronous>, transform_indices = @transform_2, window_bounds = array<i64: 2, 32>}, {pipeline_mode = #tpu.pipeline_mode<synchronous>, transform_indices = @transform_3, window_bounds = array<i64: 32, 128>}, {pipeline_mode = #tpu.pipeline_mode<synchronous>, transform_indices = @transform_4, window_bounds = array<i64: 1, 128>}, {pipeline_mode = #tpu.pipeline_mode<synchronous>, transform_indices = @transform_5, window_bounds = array<i64: 32, 128>}, {pipeline_mode = #tpu.pipeline_mode<synchronous>, transform_indices = @transform_6, window_bounds = array<i64: 1, 128>}, {pipeline_mode = #tpu.pipeline_mode<synchronous>, transform_indices = @transform_7, window_bounds = array<i64: 16, 128>}, {pipeline_mode = #tpu.pipeline_mode<synchronous>, transform_indices = @transform_8, window_bounds = array<i64: 2, 32>}]} {
    %c0 = arith.constant 0 : index
    %c0_0 = arith.constant 0 : index
    %0 = vector.load %arg1[%c0, %c0_0] : memref<16x1xi32, #tpu.memory_space<vmem>>, vector<16x1xi32>
    %1 = tpu.iota {dimensions = array<i32: 1>} : vector<16x16xi32>
    %2 = vector.broadcast %0 : vector<16x1xi32> to vector<16x16xi32>
    %3 = arith.cmpi eq, %1, %2 : vector<16x16xi32>
    %4 = arith.extui %3 : vector<16x16xi1> to vector<16x16xi32>
    %5 = arith.sitofp %4 : vector<16x16xi32> to vector<16x16xf32>
    %c0_1 = arith.constant 0 : index
    %c0_2 = arith.constant 0 : index
    %6 = vector.load %arg2[%c0_1, %c0_2] : memref<16x128xf32, #tpu.memory_space<vmem>>, vector<16x128xf32>
    %cst = arith.constant dense<0.000000e+00> : vector<16x128xf32>
    %7 = tpu.matmul %5, %6, %cst {dimension_numbers = #tpu.dot_dimension_numbers<[1], [0], [0], [1], [0, 0, 1, 1], [], []>} : vector<16x16xf32>, vector<16x128xf32>, vector<16x128xf32> -> vector<16x128xf32>
    %c0_3 = arith.constant 0 : index
    %c0_4 = arith.constant 0 : index
    %8 = vector.load %arg5[%c0_3, %c0_4] : memref<1x128xf32, #tpu.memory_space<vmem>>, vector<1x128xf32>
    %9 = vector.broadcast %8 : vector<1x128xf32> to vector<16x128xf32>
    %10 = arith.addf %7, %9 : vector<16x128xf32>
    %c0_5 = arith.constant 0 : index
    %c0_6 = arith.constant 0 : index
    %11 = vector.load %arg10[%c0_5, %c0_6] : memref<16x128xf32, #tpu.memory_space<vmem>>, vector<16x128xf32>
    tpu.vector_store %arg10[%c0_5, %c0_6], %10 {strides = array<i32>} : memref<16x128xf32, #tpu.memory_space<vmem>>, vector<16x128xf32>,
    %c0_7 = arith.constant 0 : index
    %c0_8 = arith.constant 0 : index
    %12 = vector.load %arg4[%c0_7, %c0_8] : memref<32x128xf32, #tpu.memory_space<vmem>>, vector<32x128xf32>
    %c0_9 = arith.constant 0 : index
    %c0_10 = arith.constant 0 : index
    %13 = vector.load %arg3[%c0_9, %c0_10] : memref<2x32xf32, #tpu.memory_space<vmem>>, vector<2x32xf32>
    %cst_11 = arith.constant 0.000000e+00 : f32
    %14 = vector.broadcast %cst_11 : f32 to vector<2x32xf32>
    %c0_12 = arith.constant 0 : index
    %c0_13 = arith.constant 0 : index
    %15 = vector.load %arg10[%c0_12, %c0_13] : memref<16x128xf32, #tpu.memory_space<vmem>>, vector<2x128xf32>
    %cst_14 = arith.constant dense<0.000000e+00> : vector<2x128xf32>
    %16 = tpu.matmul %13, %12, %cst_14 {dimension_numbers = #tpu.dot_dimension_numbers<[1], [0], [0], [1], [0, 0, 1, 1], [], []>} : vector<2x32xf32>, vector<32x128xf32>, vector<2x128xf32> -> vector<2x128xf32>
    %17 = arith.addf %15, %16 : vector<2x128xf32>
    %18 = arith.negf %17 : vector<2x128xf32>
    %19 = math.exp %18 : vector<2x128xf32>
    %cst_15 = arith.constant 1.000000e+00 : f32
    %20 = vector.broadcast %cst_15 : f32 to vector<2x128xf32>
    %21 = arith.addf %20, %19 : vector<2x128xf32>
    %22 = arith.divf %20, %21 : vector<2x128xf32>
    %23 = math.tanh %17 : vector<2x128xf32>
    %24 = vector.extract_strided_slice %22 {offsets = [0, 0], sizes = [2, 32], strides = [1, 1]} : vector<2x128xf32> to vector<2x32xf32>
    %25 = vector.extract_strided_slice %22 {offsets = [0, 32], sizes = [2, 32], strides = [1, 1]} : vector<2x128xf32> to vector<2x32xf32>
    %26 = vector.extract_strided_slice %23 {offsets = [0, 64], sizes = [2, 32], strides = [1, 1]} : vector<2x128xf32> to vector<2x32xf32>
    %27 = vector.extract_strided_slice %22 {offsets = [0, 96], sizes = [2, 32], strides = [1, 1]} : vector<2x128xf32> to vector<2x32xf32>
    %28 = arith.mulf %25, %14 : vector<2x32xf32>
    %29 = arith.mulf %24, %26 : vector<2x32xf32>
    %30 = arith.addf %28, %29 : vector<2x32xf32>
    %31 = math.tanh %30 : vector<2x32xf32>
    %32 = arith.mulf %27, %31 : vector<2x32xf32>
    %c0_16 = arith.constant 0 : index
    %c0_17 = arith.constant 0 : index
    %33 = vector.load %arg11[%c0_16, %c0_17] : memref<16x32xf32, #tpu.memory_space<vmem>>, vector<2x32xf32>
    tpu.vector_store %arg11[%c0_16, %c0_17], %32 {strides = array<i32>} : memref<16x32xf32, #tpu.memory_space<vmem>>, vector<2x32xf32>,
    %c2 = arith.constant 2 : index
    %c0_18 = arith.constant 0 : index
    %34 = vector.load %arg10[%c2, %c0_18] : memref<16x128xf32, #tpu.memory_space<vmem>>, vector<2x128xf32>
    %cst_19 = arith.constant dense<0.000000e+00> : vector<2x128xf32>
    %35 = tpu.matmul %32, %12, %cst_19 {dimension_numbers = #tpu.dot_dimension_numbers<[1], [0], [0], [1], [0, 0, 1, 1], [], []>} : vector<2x32xf32>, vector<32x128xf32>, vector<2x128xf32> -> vector<2x128xf32>
    %36 = arith.addf %34, %35 : vector<2x128xf32>
    %37 = arith.negf %36 : vector<2x128xf32>
    %38 = math.exp %37 : vector<2x128xf32>
    %cst_20 = arith.constant 1.000000e+00 : f32
    %39 = vector.broadcast %cst_20 : f32 to vector<2x128xf32>
    %40 = arith.addf %39, %38 : vector<2x128xf32>
    %41 = arith.divf %39, %40 : vector<2x128xf32>
    %42 = math.tanh %36 : vector<2x128xf32>
    %43 = vector.extract_strided_slice %41 {offsets = [0, 0], sizes = [2, 32], strides = [1, 1]} : vector<2x128xf32> to vector<2x32xf32>
    %44 = vector.extract_strided_slice %41 {offsets = [0, 32], sizes = [2, 32], strides = [1, 1]} : vector<2x128xf32> to vector<2x32xf32>
    %45 = vector.extract_strided_slice %42 {offsets = [0, 64], sizes = [2, 32], strides = [1, 1]} : vector<2x128xf32> to vector<2x32xf32>
    %46 = vector.extract_strided_slice %41 {offsets = [0, 96], sizes = [2, 32], strides = [1, 1]} : vector<2x128xf32> to vector<2x32xf32>
    %47 = arith.mulf %44, %30 : vector<2x32xf32>
    %48 = arith.mulf %43, %45 : vector<2x32xf32>
    %49 = arith.addf %47, %48 : vector<2x32xf32>
    %50 = math.tanh %49 : vector<2x32xf32>
    %51 = arith.mulf %46, %50 : vector<2x32xf32>
    %c2_21 = arith.constant 2 : index
    %c0_22 = arith.constant 0 : index
    %52 = vector.load %arg11[%c2_21, %c0_22] : memref<16x32xf32, #tpu.memory_space<vmem>>, vector<2x32xf32>
    tpu.vector_store %arg11[%c2_21, %c0_22], %51 {strides = array<i32>} : memref<16x32xf32, #tpu.memory_space<vmem>>, vector<2x32xf32>,
    %c4 = arith.constant 4 : index
    %c0_23 = arith.constant 0 : index
    %53 = vector.load %arg10[%c4, %c0_23] : memref<16x128xf32, #tpu.memory_space<vmem>>, vector<2x128xf32>
    %cst_24 = arith.constant dense<0.000000e+00> : vector<2x128xf32>
    %54 = tpu.matmul %51, %12, %cst_24 {dimension_numbers = #tpu.dot_dimension_numbers<[1], [0], [0], [1], [0, 0, 1, 1], [], []>} : vector<2x32xf32>, vector<32x128xf32>, vector<2x128xf32> -> vector<2x128xf32>
    %55 = arith.addf %53, %54 : vector<2x128xf32>
    %56 = arith.negf %55 : vector<2x128xf32>
    %57 = math.exp %56 : vector<2x128xf32>
    %cst_25 = arith.constant 1.000000e+00 : f32
    %58 = vector.broadcast %cst_25 : f32 to vector<2x128xf32>
    %59 = arith.addf %58, %57 : vector<2x128xf32>
    %60 = arith.divf %58, %59 : vector<2x128xf32>
    %61 = math.tanh %55 : vector<2x128xf32>
    %62 = vector.extract_strided_slice %60 {offsets = [0, 0], sizes = [2, 32], strides = [1, 1]} : vector<2x128xf32> to vector<2x32xf32>
    %63 = vector.extract_strided_slice %60 {offsets = [0, 32], sizes = [2, 32], strides = [1, 1]} : vector<2x128xf32> to vector<2x32xf32>
    %64 = vector.extract_strided_slice %61 {offsets = [0, 64], sizes = [2, 32], strides = [1, 1]} : vector<2x128xf32> to vector<2x32xf32>
    %65 = vector.extract_strided_slice %60 {offsets = [0, 96], sizes = [2, 32], strides = [1, 1]} : vector<2x128xf32> to vector<2x32xf32>
    %66 = arith.mulf %63, %49 : vector<2x32xf32>
    %67 = arith.mulf %62, %64 : vector<2x32xf32>
    %68 = arith.addf %66, %67 : vector<2x32xf32>
    %69 = math.tanh %68 : vector<2x32xf32>
    %70 = arith.mulf %65, %69 : vector<2x32xf32>
    %c4_26 = arith.constant 4 : index
    %c0_27 = arith.constant 0 : index
    %71 = vector.load %arg11[%c4_26, %c0_27] : memref<16x32xf32, #tpu.memory_space<vmem>>, vector<2x32xf32>
    tpu.vector_store %arg11[%c4_26, %c0_27], %70 {strides = array<i32>} : memref<16x32xf32, #tpu.memory_space<vmem>>, vector<2x32xf32>,
    %c6 = arith.constant 6 : index
    %c0_28 = arith.constant 0 : index
    %72 = vector.load %arg10[%c6, %c0_28] : memref<16x128xf32, #tpu.memory_space<vmem>>, vector<2x128xf32>
    %cst_29 = arith.constant dense<0.000000e+00> : vector<2x128xf32>
    %73 = tpu.matmul %70, %12, %cst_29 {dimension_numbers = #tpu.dot_dimension_numbers<[1], [0], [0], [1], [0, 0, 1, 1], [], []>} : vector<2x32xf32>, vector<32x128xf32>, vector<2x128xf32> -> vector<2x128xf32>
    %74 = arith.addf %72, %73 : vector<2x128xf32>
    %75 = arith.negf %74 : vector<2x128xf32>
    %76 = math.exp %75 : vector<2x128xf32>
    %cst_30 = arith.constant 1.000000e+00 : f32
    %77 = vector.broadcast %cst_30 : f32 to vector<2x128xf32>
    %78 = arith.addf %77, %76 : vector<2x128xf32>
    %79 = arith.divf %77, %78 : vector<2x128xf32>
    %80 = math.tanh %74 : vector<2x128xf32>
    %81 = vector.extract_strided_slice %79 {offsets = [0, 0], sizes = [2, 32], strides = [1, 1]} : vector<2x128xf32> to vector<2x32xf32>
    %82 = vector.extract_strided_slice %79 {offsets = [0, 32], sizes = [2, 32], strides = [1, 1]} : vector<2x128xf32> to vector<2x32xf32>
    %83 = vector.extract_strided_slice %80 {offsets = [0, 64], sizes = [2, 32], strides = [1, 1]} : vector<2x128xf32> to vector<2x32xf32>
    %84 = vector.extract_strided_slice %79 {offsets = [0, 96], sizes = [2, 32], strides = [1, 1]} : vector<2x128xf32> to vector<2x32xf32>
    %85 = arith.mulf %82, %68 : vector<2x32xf32>
    %86 = arith.mulf %81, %83 : vector<2x32xf32>
    %87 = arith.addf %85, %86 : vector<2x32xf32>
    %88 = math.tanh %87 : vector<2x32xf32>
    %89 = arith.mulf %84, %88 : vector<2x32xf32>
    %c6_31 = arith.constant 6 : index
    %c0_32 = arith.constant 0 : index
    %90 = vector.load %arg11[%c6_31, %c0_32] : memref<16x32xf32, #tpu.memory_space<vmem>>, vector<2x32xf32>
    tpu.vector_store %arg11[%c6_31, %c0_32], %89 {strides = array<i32>} : memref<16x32xf32, #tpu.memory_space<vmem>>, vector<2x32xf32>,
    %c8 = arith.constant 8 : index
    %c0_33 = arith.constant 0 : index
    %91 = vector.load %arg10[%c8, %c0_33] : memref<16x128xf32, #tpu.memory_space<vmem>>, vector<2x128xf32>
    %cst_34 = arith.constant dense<0.000000e+00> : vector<2x128xf32>
    %92 = tpu.matmul %89, %12, %cst_34 {dimension_numbers = #tpu.dot_dimension_numbers<[1], [0], [0], [1], [0, 0, 1, 1], [], []>} : vector<2x32xf32>, vector<32x128xf32>, vector<2x128xf32> -> vector<2x128xf32>
    %93 = arith.addf %91, %92 : vector<2x128xf32>
    %94 = arith.negf %93 : vector<2x128xf32>
    %95 = math.exp %94 : vector<2x128xf32>
    %cst_35 = arith.constant 1.000000e+00 : f32
    %96 = vector.broadcast %cst_35 : f32 to vector<2x128xf32>
    %97 = arith.addf %96, %95 : vector<2x128xf32>
    %98 = arith.divf %96, %97 : vector<2x128xf32>
    %99 = math.tanh %93 : vector<2x128xf32>
    %100 = vector.extract_strided_slice %98 {offsets = [0, 0], sizes = [2, 32], strides = [1, 1]} : vector<2x128xf32> to vector<2x32xf32>
    %101 = vector.extract_strided_slice %98 {offsets = [0, 32], sizes = [2, 32], strides = [1, 1]} : vector<2x128xf32> to vector<2x32xf32>
    %102 = vector.extract_strided_slice %99 {offsets = [0, 64], sizes = [2, 32], strides = [1, 1]} : vector<2x128xf32> to vector<2x32xf32>
    %103 = vector.extract_strided_slice %98 {offsets = [0, 96], sizes = [2, 32], strides = [1, 1]} : vector<2x128xf32> to vector<2x32xf32>
    %104 = arith.mulf %101, %87 : vector<2x32xf32>
    %105 = arith.mulf %100, %102 : vector<2x32xf32>
    %106 = arith.addf %104, %105 : vector<2x32xf32>
    %107 = math.tanh %106 : vector<2x32xf32>
    %108 = arith.mulf %103, %107 : vector<2x32xf32>
    %c8_36 = arith.constant 8 : index
    %c0_37 = arith.constant 0 : index
    %109 = vector.load %arg11[%c8_36, %c0_37] : memref<16x32xf32, #tpu.memory_space<vmem>>, vector<2x32xf32>
    tpu.vector_store %arg11[%c8_36, %c0_37], %108 {strides = array<i32>} : memref<16x32xf32, #tpu.memory_space<vmem>>, vector<2x32xf32>,
    %c10 = arith.constant 10 : index
    %c0_38 = arith.constant 0 : index
    %110 = vector.load %arg10[%c10, %c0_38] : memref<16x128xf32, #tpu.memory_space<vmem>>, vector<2x128xf32>
    %cst_39 = arith.constant dense<0.000000e+00> : vector<2x128xf32>
    %111 = tpu.matmul %108, %12, %cst_39 {dimension_numbers = #tpu.dot_dimension_numbers<[1], [0], [0], [1], [0, 0, 1, 1], [], []>} : vector<2x32xf32>, vector<32x128xf32>, vector<2x128xf32> -> vector<2x128xf32>
    %112 = arith.addf %110, %111 : vector<2x128xf32>
    %113 = arith.negf %112 : vector<2x128xf32>
    %114 = math.exp %113 : vector<2x128xf32>
    %cst_40 = arith.constant 1.000000e+00 : f32
    %115 = vector.broadcast %cst_40 : f32 to vector<2x128xf32>
    %116 = arith.addf %115, %114 : vector<2x128xf32>
    %117 = arith.divf %115, %116 : vector<2x128xf32>
    %118 = math.tanh %112 : vector<2x128xf32>
    %119 = vector.extract_strided_slice %117 {offsets = [0, 0], sizes = [2, 32], strides = [1, 1]} : vector<2x128xf32> to vector<2x32xf32>
    %120 = vector.extract_strided_slice %117 {offsets = [0, 32], sizes = [2, 32], strides = [1, 1]} : vector<2x128xf32> to vector<2x32xf32>
    %121 = vector.extract_strided_slice %118 {offsets = [0, 64], sizes = [2, 32], strides = [1, 1]} : vector<2x128xf32> to vector<2x32xf32>
    %122 = vector.extract_strided_slice %117 {offsets = [0, 96], sizes = [2, 32], strides = [1, 1]} : vector<2x128xf32> to vector<2x32xf32>
    %123 = arith.mulf %120, %106 : vector<2x32xf32>
    %124 = arith.mulf %119, %121 : vector<2x32xf32>
    %125 = arith.addf %123, %124 : vector<2x32xf32>
    %126 = math.tanh %125 : vector<2x32xf32>
    %127 = arith.mulf %122, %126 : vector<2x32xf32>
    %c10_41 = arith.constant 10 : index
    %c0_42 = arith.constant 0 : index
    %128 = vector.load %arg11[%c10_41, %c0_42] : memref<16x32xf32, #tpu.memory_space<vmem>>, vector<2x32xf32>
    tpu.vector_store %arg11[%c10_41, %c0_42], %127 {strides = array<i32>} : memref<16x32xf32, #tpu.memory_space<vmem>>, vector<2x32xf32>,
    %c12 = arith.constant 12 : index
    %c0_43 = arith.constant 0 : index
    %129 = vector.load %arg10[%c12, %c0_43] : memref<16x128xf32, #tpu.memory_space<vmem>>, vector<2x128xf32>
    %cst_44 = arith.constant dense<0.000000e+00> : vector<2x128xf32>
    %130 = tpu.matmul %127, %12, %cst_44 {dimension_numbers = #tpu.dot_dimension_numbers<[1], [0], [0], [1], [0, 0, 1, 1], [], []>} : vector<2x32xf32>, vector<32x128xf32>, vector<2x128xf32> -> vector<2x128xf32>
    %131 = arith.addf %129, %130 : vector<2x128xf32>
    %132 = arith.negf %131 : vector<2x128xf32>
    %133 = math.exp %132 : vector<2x128xf32>
    %cst_45 = arith.constant 1.000000e+00 : f32
    %134 = vector.broadcast %cst_45 : f32 to vector<2x128xf32>
    %135 = arith.addf %134, %133 : vector<2x128xf32>
    %136 = arith.divf %134, %135 : vector<2x128xf32>
    %137 = math.tanh %131 : vector<2x128xf32>
    %138 = vector.extract_strided_slice %136 {offsets = [0, 0], sizes = [2, 32], strides = [1, 1]} : vector<2x128xf32> to vector<2x32xf32>
    %139 = vector.extract_strided_slice %136 {offsets = [0, 32], sizes = [2, 32], strides = [1, 1]} : vector<2x128xf32> to vector<2x32xf32>
    %140 = vector.extract_strided_slice %137 {offsets = [0, 64], sizes = [2, 32], strides = [1, 1]} : vector<2x128xf32> to vector<2x32xf32>
    %141 = vector.extract_strided_slice %136 {offsets = [0, 96], sizes = [2, 32], strides = [1, 1]} : vector<2x128xf32> to vector<2x32xf32>
    %142 = arith.mulf %139, %125 : vector<2x32xf32>
    %143 = arith.mulf %138, %140 : vector<2x32xf32>
    %144 = arith.addf %142, %143 : vector<2x32xf32>
    %145 = math.tanh %144 : vector<2x32xf32>
    %146 = arith.mulf %141, %145 : vector<2x32xf32>
    %c12_46 = arith.constant 12 : index
    %c0_47 = arith.constant 0 : index
    %147 = vector.load %arg11[%c12_46, %c0_47] : memref<16x32xf32, #tpu.memory_space<vmem>>, vector<2x32xf32>
    tpu.vector_store %arg11[%c12_46, %c0_47], %146 {strides = array<i32>} : memref<16x32xf32, #tpu.memory_space<vmem>>, vector<2x32xf32>,
    %c14 = arith.constant 14 : index
    %c0_48 = arith.constant 0 : index
    %148 = vector.load %arg10[%c14, %c0_48] : memref<16x128xf32, #tpu.memory_space<vmem>>, vector<2x128xf32>
    %cst_49 = arith.constant dense<0.000000e+00> : vector<2x128xf32>
    %149 = tpu.matmul %146, %12, %cst_49 {dimension_numbers = #tpu.dot_dimension_numbers<[1], [0], [0], [1], [0, 0, 1, 1], [], []>} : vector<2x32xf32>, vector<32x128xf32>, vector<2x128xf32> -> vector<2x128xf32>
    %150 = arith.addf %148, %149 : vector<2x128xf32>
    %151 = arith.negf %150 : vector<2x128xf32>
    %152 = math.exp %151 : vector<2x128xf32>
    %cst_50 = arith.constant 1.000000e+00 : f32
    %153 = vector.broadcast %cst_50 : f32 to vector<2x128xf32>
    %154 = arith.addf %153, %152 : vector<2x128xf32>
    %155 = arith.divf %153, %154 : vector<2x128xf32>
    %156 = math.tanh %150 : vector<2x128xf32>
    %157 = vector.extract_strided_slice %155 {offsets = [0, 0], sizes = [2, 32], strides = [1, 1]} : vector<2x128xf32> to vector<2x32xf32>
    %158 = vector.extract_strided_slice %155 {offsets = [0, 32], sizes = [2, 32], strides = [1, 1]} : vector<2x128xf32> to vector<2x32xf32>
    %159 = vector.extract_strided_slice %156 {offsets = [0, 64], sizes = [2, 32], strides = [1, 1]} : vector<2x128xf32> to vector<2x32xf32>
    %160 = vector.extract_strided_slice %155 {offsets = [0, 96], sizes = [2, 32], strides = [1, 1]} : vector<2x128xf32> to vector<2x32xf32>
    %161 = arith.mulf %158, %144 : vector<2x32xf32>
    %162 = arith.mulf %157, %159 : vector<2x32xf32>
    %163 = arith.addf %161, %162 : vector<2x32xf32>
    %164 = math.tanh %163 : vector<2x32xf32>
    %165 = arith.mulf %160, %164 : vector<2x32xf32>
    %c14_51 = arith.constant 14 : index
    %c0_52 = arith.constant 0 : index
    %166 = vector.load %arg11[%c14_51, %c0_52] : memref<16x32xf32, #tpu.memory_space<vmem>>, vector<2x32xf32>
    tpu.vector_store %arg11[%c14_51, %c0_52], %165 {strides = array<i32>} : memref<16x32xf32, #tpu.memory_space<vmem>>, vector<2x32xf32>,
    %c0_53 = arith.constant 0 : index
    %c0_54 = arith.constant 0 : index
    %167 = vector.load %arg11[%c0_53, %c0_54] : memref<16x32xf32, #tpu.memory_space<vmem>>, vector<16x32xf32>
    %c0_55 = arith.constant 0 : index
    %c0_56 = arith.constant 0 : index
    %168 = vector.load %arg6[%c0_55, %c0_56] : memref<32x128xf32, #tpu.memory_space<vmem>>, vector<32x128xf32>
    %cst_57 = arith.constant dense<0.000000e+00> : vector<16x128xf32>
    %169 = tpu.matmul %167, %168, %cst_57 {dimension_numbers = #tpu.dot_dimension_numbers<[1], [0], [0], [1], [0, 0, 1, 1], [], []>} : vector<16x32xf32>, vector<32x128xf32>, vector<16x128xf32> -> vector<16x128xf32>
    %c0_58 = arith.constant 0 : index
    %c0_59 = arith.constant 0 : index
    %170 = vector.load %arg7[%c0_58, %c0_59] : memref<1x128xf32, #tpu.memory_space<vmem>>, vector<1x128xf32>
    %171 = vector.broadcast %170 : vector<1x128xf32> to vector<16x128xf32>
    %172 = arith.addf %169, %171 : vector<16x128xf32>
    %c0_60 = arith.constant 0 : index
    %c0_61 = arith.constant 0 : index
    %173 = vector.load %arg8[%c0_60, %c0_61] : memref<16x128xf32, #tpu.memory_space<vmem>>, vector<16x128xf32>
    tpu.vector_store %arg8[%c0_60, %c0_61], %172 {strides = array<i32>} : memref<16x128xf32, #tpu.memory_space<vmem>>, vector<16x128xf32>,
    %c0_62 = arith.constant 0 : index
    %c0_63 = arith.constant 0 : index
    %174 = vector.load %arg9[%c0_62, %c0_63] : memref<2x32xf32, #tpu.memory_space<vmem>>, vector<2x32xf32>
    tpu.vector_store %arg9[%c0_62, %c0_63], %165 {strides = array<i32>} : memref<2x32xf32, #tpu.memory_space<vmem>>, vector<2x32xf32>,
    return
  }
  func.func @transform_0(%arg0: i32) -> (i32, i32) {
    %c0_i32 = arith.constant 0 : i32
    %c0_i32_0 = arith.constant 0 : i32
    %c0_i32_1 = arith.constant 0 : i32
    return %c0_i32, %c0_i32_0 : i32, i32
  }
  func.func @transform_1(%arg0: i32) -> (i32, i32) {
    %c0_i32 = arith.constant 0 : i32
    %c0_i32_0 = arith.constant 0 : i32
    %c0_i32_1 = arith.constant 0 : i32
    return %c0_i32, %c0_i32_0 : i32, i32
  }
  func.func @transform_2(%arg0: i32) -> (i32, i32) {
    %c0_i32 = arith.constant 0 : i32
    %c0_i32_0 = arith.constant 0 : i32
    %c0_i32_1 = arith.constant 0 : i32
    return %c0_i32, %c0_i32_0 : i32, i32
  }
  func.func @transform_3(%arg0: i32) -> (i32, i32) {
    %c0_i32 = arith.constant 0 : i32
    %c0_i32_0 = arith.constant 0 : i32
    %c0_i32_1 = arith.constant 0 : i32
    return %c0_i32, %c0_i32_0 : i32, i32
  }
  func.func @transform_4(%arg0: i32) -> (i32, i32) {
    %c0_i32 = arith.constant 0 : i32
    %c0_i32_0 = arith.constant 0 : i32
    %c0_i32_1 = arith.constant 0 : i32
    return %c0_i32, %c0_i32_0 : i32, i32
  }
  func.func @transform_5(%arg0: i32) -> (i32, i32) {
    %c0_i32 = arith.constant 0 : i32
    %c0_i32_0 = arith.constant 0 : i32
    %c0_i32_1 = arith.constant 0 : i32
    return %c0_i32, %c0_i32_0 : i32, i32
  }
  func.func @transform_6(%arg0: i32) -> (i32, i32) {
    %c0_i32 = arith.constant 0 : i32
    %c0_i32_0 = arith.constant 0 : i32
    %c0_i32_1 = arith.constant 0 : i32
    return %c0_i32, %c0_i32_0 : i32, i32
  }
  func.func @transform_7(%arg0: i32) -> (i32, i32) {
    %c0_i32 = arith.constant 0 : i32
    %c0_i32_0 = arith.constant 0 : i32
    %c0_i32_1 = arith.constant 0 : i32
    return %c0_i32, %c0_i32_0 : i32, i32
  }
  func.func @transform_8(%arg0: i32) -> (i32, i32) {
    %c0_i32 = arith.constant 0 : i32
    %c0_i32_0 = arith.constant 0 : i32
    %c0_i32_1 = arith.constant 0 : i32
    return %c0_i32, %c0_i32_0 : i32, i32
  }
}

</mosaic_0001>

<llo_original>
// kernel: step_selector_decoder_forward.1
$region0: #{step_selector_decoder_forward.1}
  #allocation0 [shape = 'u32[]', space=smem, size = 0x4, offset = 0x4, fixed_abs, tag = 'smem constant byte address 0x4 - core index']
  #allocation1 [shape = 'u32[144,128]{1,0:T(1,128)}', space=vmem, size = 0x12000, scoped, tag = 'internal scratch']
  #allocation2 [shape = 'f32[16,128]{1,0:T(8,128)}', space=vmem, size = 0x2000, scoped, tag = 'scratch operand']
  #allocation3 [shape = 'f32[16,32]{1,0:T(8,128)}', space=vmem, size = 0x2000, scoped, tag = 'scratch operand']
  %s0 = inlined_call_operand.vmem [shape: s32[16,1], index: 0, kind: input, shape index: {}]
  %s1 = inlined_call_operand.vmem [shape: f32[16,128], index: 1, kind: input, shape index: {}]
  %s2 = inlined_call_operand.vmem [shape: f32[2,32], index: 2, kind: input, shape index: {}]
  %s3 = inlined_call_operand.vmem [shape: f32[32,128], index: 3, kind: input, shape index: {}]
  %s4 = inlined_call_operand.vmem [shape: f32[1,128], index: 4, kind: input, shape index: {}]
  %s5 = inlined_call_operand.hbm [shape: f32[32,128], index: 5, kind: input, shape index: {}]
  %s6 = inlined_call_operand.vmem [shape: f32[1,128], index: 6, kind: input, shape index: {}]
  %s7 = inlined_call_operand.hbm [shape: f32[16,128], index: 7, kind: output, shape index: {0}]
  %s8 = inlined_call_operand.hbm [shape: f32[2,32], index: 8, kind: output, shape index: {1}]
  %9 = xla_tuple %s7, %s8
  %s10 = sld [smem:[#allocation0]]
  $region50: #{step_selector_decoder_forward.1} parent=0
    _
  %s12 = ssub.s32 1, %s10
  %s13 = scalar_select 0, %s12, %s10
  $region1: #{step_selector_decoder_forward.1} parent=0
    #allocation4 [shape = 'u8[16384]{0}', space=vmem, size = 0x4000, scoped, tag = 'input window, operand 5, single buffered']
    #allocation5 [shape = 's32[1]{0}', space=sflag, size = 0x4, scoped, tag = 'scoped memory for step_selector_decoder_forward.1']
    #allocation6 [shape = 's32[1]{0}', space=sflag, size = 0x4, scoped, tag = 'scoped memory for step_selector_decoder_forward.1']
    #allocation7 [shape = 'u8[8192]{0}', space=vmem, size = 0x2000, scoped, tag = 'output window, operand 0, single buffered']
    #allocation8 [shape = 'u8[1024]{0}', space=vmem, size = 0x400, scoped, tag = 'output window, operand 1, single buffered']
    #allocation9 [shape = 's32[1]{0}', space=sflag, size = 0x4, scoped, tag = 'scoped memory for step_selector_decoder_forward.1']
    %14 = vsyncpa [#allocation5], 0
    %15 = vsyncpa [#allocation6], 0
    %16 = vsyncpa [#allocation9], 0
    // Predicated region
    $region2: #{step_selector_decoder_forward.1} parent=1 // pred_check
      _
    $region3: #{step_selector_decoder_forward.1} parent=1 // pred_check_branch
      %18 = sbr.rel (0) target = $region5
    $region4: #{step_selector_decoder_forward.1} parent=1 // pred_region
      _
    $region5: #{step_selector_decoder_forward.1} parent=1 // pred_fallthru
      _
    // Predicated region
    $region6: #{step_selector_decoder_forward.1} parent=1 // pred_check
      _
    $region7: #{step_selector_decoder_forward.1} parent=1 // pred_check_branch
      %20 = sbr.rel (0) target = $region9
    $region8: #{step_selector_decoder_forward.1} parent=1 // pred_region
      _
    $region9: #{step_selector_decoder_forward.1} parent=1 // pred_fallthru
      _
    // Predicated region
    $region10: #{step_selector_decoder_forward.1} parent=1 // pred_check
      _
    $region11: #{step_selector_decoder_forward.1} parent=1 // pred_check_branch
      %22 = sbr.rel (0) target = $region13
    $region12: #{step_selector_decoder_forward.1} parent=1 // pred_region
      _
    $region13: #{step_selector_decoder_forward.1} parent=1 // pred_fallthru
      _
    // Predicated region
    $region14: #{step_selector_decoder_forward.1} parent=1 // pred_check
      _
    $region15: #{step_selector_decoder_forward.1} parent=1 // pred_check_branch
      %24 = sbr.rel (0) target = $region17
    $region16: #{step_selector_decoder_forward.1} parent=1 // pred_region
      _
    $region17: #{step_selector_decoder_forward.1} parent=1 // pred_fallthru
      _
    // Predicated region
    $region18: #{step_selector_decoder_forward.1} parent=1 // pred_check
      _
    $region19: #{step_selector_decoder_forward.1} parent=1 // pred_check_branch
      %26 = sbr.rel (0) target = $region21
    $region20: #{step_selector_decoder_forward.1} parent=1 // pred_region
      _
    $region21: #{step_selector_decoder_forward.1} parent=1 // pred_fallthru
      _
    // Predicated region
    $region22: #{step_selector_decoder_forward.1} parent=1 // pred_check
      _
    $region23: #{step_selector_decoder_forward.1} parent=1 // pred_check_branch
      %28 = sbr.rel (0) target = $region25
    $region24: #{step_selector_decoder_forward.1} parent=1 // pred_region
      %s30 = ssub.s32 512, 512
      %31 = vsyncadd [#allocation5], %s30
      %s32 = sshll.u32 [#allocation4], 4
      %s33 = int_to_ptr.vmem [resolvable:$true] %s32
      %38 = dma.hbm_to_vmem [thread:$0]  %s5, 512, %s33, [#allocation5], 128, 128, 8
    $region25: #{step_selector_decoder_forward.1} parent=1 // pred_fallthru
      _
    // Predicated region
    $region26: #{step_selector_decoder_forward.1} parent=1 // pred_check
      _
    $region27: #{step_selector_decoder_forward.1} parent=1 // pred_check_branch
      %40 = sbr.rel (0) target = $region29
    $region28: #{step_selector_decoder_forward.1} parent=1 // pred_region
      _
    $region29: #{step_selector_decoder_forward.1} parent=1 // pred_fallthru
      _
    // Predicated region
    $region30: #{step_selector_decoder_forward.1} parent=1 // pred_check
      _
    $region31: #{step_selector_decoder_forward.1} parent=1 // pred_check_branch
      %42 = sbr.rel (0) target = $region33
    $region32: #{step_selector_decoder_forward.1} parent=1 // pred_region
      %43 = dma.done [#allocation5], 512
    $region33: #{step_selector_decoder_forward.1} parent=1 // pred_fallthru
      _
    %v44 = vld [vmem:[%s0] sm:$0xff]
    %v45 = vld [vmem:[%s0 + $0x8] sm:$0xff]
    %v46 = vlaneseq
    %v47 = vand.u32 %v46, 127
    %48 = vset.pattern.permute.xlu0 0
    %49 = vperm.xlu0 %48, %v44
    %v50 = vpop.permute.xlu0 %49
    %51 = vset.pattern.permute.xlu0 0
    %52 = vperm.xlu0 %51, %v45
    %v53 = vpop.permute.xlu0 %52
    %vm54 = vcmp.eq.s32.totalorder %v47, %v50
    %vm55 = vcmp.eq.s32.totalorder %v47, %v53
    %v56 = vsel %vm54, 1, 0
    %v57 = vsel %vm55, 1, 0
    %v58 = vcvt.s32.f32 %v56
    %v59 = vcvt.s32.f32 %v57
    %v60 = vld [vmem:[%s1] sm:$0xff]
    %v61 = vld [vmem:[%s1 + $0x8] sm:$0xff]
    %v62 = vld [vmem:[%s4] sm:$0x1]
    %v64 = vlaneseq
    %v65 = vshrl.u32 %v64, 7
    %v66 = vsub.s32 0, %v65
    %v67 = vrot.slane %v62, %v66
    %vm69 = vcmask 130048
    %v71 = vsel %vm69, %v58, 0
    %v74 = vsel %vm69, %v59, 0
    %76 = vmatprep.subr.mxu0 0.0
    %77 = vmatpush1.msra.mxu0 %v60
    %78 = vmatprep.subr.mxu0 0.0
    %79 = vmatpush1.msra.mxu0 %v61
    %80 = vmatprep.subr.mxu0 0.0
    %81 = vmatpush1.msra.mxu0 0.0
    %82 = vmatprep.subr.mxu0 0.0
    %83 = vmatpush1.msra.mxu0 0.0
    %84 = vmatprep.subr.mxu0 0.0
    %85 = vmatpush1.msra.mxu0 0.0
    %86 = vmatprep.subr.mxu0 0.0
    %87 = vmatpush1.msra.mxu0 0.0
    %88 = vmatprep.subr.mxu0 0.0
    %89 = vmatpush1.msra.mxu0 0.0
    %90 = vmatprep.subr.mxu0 0.0
    %91 = vmatpush1.msra.mxu0 0.0
    %92 = vmatprep.subr.mxu0 0.0
    %93 = vmatpush1.msra.mxu0 0.0
    %94 = vmatprep.subr.mxu0 0.0
    %95 = vmatpush1.msra.mxu0 0.0
    %96 = vmatprep.subr.mxu0 0.0
    %97 = vmatpush1.msra.mxu0 0.0
    %98 = vmatprep.subr.mxu0 0.0
    %99 = vmatpush1.msra.mxu0 0.0
    %100 = vmatprep.subr.mxu0 0.0
    %101 = vmatpush1.msra.mxu0 0.0
    %102 = vmatprep.subr.mxu0 0.0
    %103 = vmatpush1.msra.mxu0 0.0
    %104 = vmatprep.subr.mxu0 0.0
    %105 = vmatpush1.msra.mxu0 0.0
    %106 = vmatprep.subr.mxu0 0.0
    %107 = vmatpush1.msra.mxu0 0.0
    %108 = vmatprep.subr.mxu0 0.0
    %109 = vmatpush1.msra.mxu0 0.0
    %110 = vmatprep.subr.mxu0 0.0
    %111 = vmatpush1.msra.mxu0 0.0
    %112 = vmatprep.subr.mxu0 0.0
    %113 = vmatpush1.msra.mxu0 0.0
    %114 = vmatprep.subr.mxu0 0.0
    %115 = vmatpush1.msra.mxu0 0.0
    %116 = vmatprep.subr.mxu0 0.0
    %117 = vmatpush1.msra.mxu0 0.0
    %118 = vmatprep.subr.mxu0 0.0
    %119 = vmatpush1.msra.mxu0 0.0
    %120 = vmatprep.subr.mxu0 0.0
    %121 = vmatpush1.msra.mxu0 0.0
    %122 = vmatprep.subr.mxu0 0.0
    %123 = vmatpush1.msra.mxu0 0.0
    %124 = vmatprep.subr.mxu0 0.0
    %125 = vmatpush1.msra.mxu0 0.0
    %126 = vmatprep.subr.mxu0 0.0
    %127 = vmatpush1.msra.mxu0 0.0
    %128 = vmatprep.subr.mxu0 0.0
    %129 = vmatpush1.msra.mxu0 0.0
    %130 = vmatprep.subr.mxu0 0.0
    %131 = vmatpush1.msra.mxu0 0.0
    %132 = vmatprep.subr.mxu0 0.0
    %133 = vmatpush1.msra.mxu0 0.0
    %134 = vmatprep.subr.mxu0 0.0
    %135 = vmatpush1.msra.mxu0 0.0
    %136 = vmatprep.subr.mxu0 0.0
    %137 = vmatpush1.msra.mxu0 0.0
    %138 = vmatprep.subr.mxu0 0.0
    %139 = vmatpush1.msra.mxu0 0.0
    %140 = vmatprep.mubr.f32.mxu0 0.0
    %141 = vmatmul.mubr.f32.gmra.mrb[0].mxu0 %v71
    %v142 = vpop.f32.mrb[0].mxu0
    %v143 = vadd.f32 %v67, %v142
    %v144 = vpop.f32.mrb[0].mxu0
    %145 = vmatprep.mubr.f32.mxu0 0.0
    %146 = vmatmul.mubr.f32.gmra.mrb[0].mxu0 %v74
    %v147 = vpop.f32.mrb[0].mxu0
    %v148 = vadd.f32 %v67, %v147
    %v149 = vpop.f32.mrb[0].mxu0
    %150 = vdwg.mxu0
    %151 = vst [vmem:[#allocation2] sm:$0xff] %v143
    %152 = vst [vmem:[#allocation2 + $0x8] sm:$0xff] %v148
    %v153 = vld [vmem:[%s3] sm:$0xff]
    %v154 = vld [vmem:[%s3 + $0x8] sm:$0xff]
    %v155 = vld [vmem:[%s3 + $0x10] sm:$0xff]
    %v156 = vld [vmem:[%s3 + $0x18] sm:$0xff]
    %v157 = vld [vmem:[%s2] sm:$0x3]
    %v158 = vld [vmem:[#allocation2] sm:$0x3]
    %vm159 = vcmask 261120
    %v161 = vsel %vm159, %v157, 0
    %163 = vmatprep.subr.mxu0 0.0
    %164 = vmatpush1.msra.mxu0 %v153
    %165 = vmatprep.subr.mxu0 0.0
    %166 = vmatpush1.msra.mxu0 %v154
    %167 = vmatprep.subr.mxu0 0.0
    %168 = vmatpush1.msra.mxu0 %v155
    %169 = vmatprep.subr.mxu0 0.0
    %170 = vmatpush1.msra.mxu0 %v156
    %171 = vmatprep.subr.mxu0 0.0
    %172 = vmatpush1.msra.mxu0 0.0
    %173 = vmatprep.subr.mxu0 0.0
    %174 = vmatpush1.msra.mxu0 0.0
    %175 = vmatprep.subr.mxu0 0.0
    %176 = vmatpush1.msra.mxu0 0.0
    %177 = vmatprep.subr.mxu0 0.0
    %178 = vmatpush1.msra.mxu0 0.0
    %179 = vmatprep.subr.mxu0 0.0
    %180 = vmatpush1.msra.mxu0 0.0
    %181 = vmatprep.subr.mxu0 0.0
    %182 = vmatpush1.msra.mxu0 0.0
    %183 = vmatprep.subr.mxu0 0.0
    %184 = vmatpush1.msra.mxu0 0.0
    %185 = vmatprep.subr.mxu0 0.0
    %186 = vmatpush1.msra.mxu0 0.0
    %187 = vmatprep.subr.mxu0 0.0
    %188 = vmatpush1.msra.mxu0 0.0
    %189 = vmatprep.subr.mxu0 0.0
    %190 = vmatpush1.msra.mxu0 0.0
    %191 = vmatprep.subr.mxu0 0.0
    %192 = vmatpush1.msra.mxu0 0.0
    %193 = vmatprep.subr.mxu0 0.0
    %194 = vmatpush1.msra.mxu0 0.0
    %195 = vmatprep.subr.mxu0 0.0
    %196 = vmatpush1.msra.mxu0 0.0
    %197 = vmatprep.subr.mxu0 0.0
    %198 = vmatpush1.msra.mxu0 0.0
    %199 = vmatprep.subr.mxu0 0.0
    %200 = vmatpush1.msra.mxu0 0.0
    %201 = vmatprep.subr.mxu0 0.0
    %202 = vmatpush1.msra.mxu0 0.0
    %203 = vmatprep.subr.mxu0 0.0
    %204 = vmatpush1.msra.mxu0 0.0
    %205 = vmatprep.subr.mxu0 0.0
    %206 = vmatpush1.msra.mxu0 0.0
    %207 = vmatprep.subr.mxu0 0.0
    %208 = vmatpush1.msra.mxu0 0.0
    %209 = vmatprep.subr.mxu0 0.0
    %210 = vmatpush1.msra.mxu0 0.0
    %211 = vmatprep.subr.mxu0 0.0
    %212 = vmatpush1.msra.mxu0 0.0
    %213 = vmatprep.subr.mxu0 0.0
    %214 = vmatpush1.msra.mxu0 0.0
    %215 = vmatprep.subr.mxu0 0.0
    %216 = vmatpush1.msra.mxu0 0.0
    %217 = vmatprep.subr.mxu0 0.0
    %218 = vmatpush1.msra.mxu0 0.0
    %219 = vmatprep.subr.mxu0 0.0
    %220 = vmatpush1.msra.mxu0 0.0
    %221 = vmatprep.subr.mxu0 0.0
    %222 = vmatpush1.msra.mxu0 0.0
    %223 = vmatprep.subr.mxu0 0.0
    %224 = vmatpush1.msra.mxu0 0.0
    %225 = vmatprep.subr.mxu0 0.0
    %226 = vmatpush1.msra.mxu0 0.0
    %227 = vmatprep.mubr.f32.mxu0 0.0
    %228 = vmatmul.mubr.f32.gmra.mrb[0].mxu0 %v161
    %v229 = vpop.f32.mrb[0].mxu0
    %v230 = vadd.f32 0.0, %v229
    %v231 = vpop.f32.mrb[0].mxu0
    %232 = vdwg.mxu0
    %v233 = vadd.f32 %v158, %v230
    %v234 = vxor.u32 %v233, 2147483648
    %v235 = vmul.f32 %v234, 1.442695
    %v236 = vpow.pop %v235
    %v237 = vadd.f32 %v236, 1.0
    %v238 = vrcp.pop %v237
    %v239 = vmul.f32 1.0, %v238
    %v240 = vtanh.pop %v233
    %v241 = vmul.f32 %v239, 0.0
    %243 = vrot.lane.b32.xlu0 %v240, 64
    %v244 = vpop.permute.xlu0 %243
    %v246 = vmul.f32 %v239, %v244
    %248 = vrot.lane.b32.xlu0 %v246, 32
    %v249 = vpop.permute.xlu0 %248
    %v251 = vadd.f32 %v241, %v249
    %v252 = vtanh.pop %v251
    %254 = vrot.lane.b32.xlu0 %v252, 64
    %v255 = vpop.permute.xlu0 %254
    %v257 = vmul.f32 %v239, %v255
    %259 = vrot.lane.b32.xlu0 %v257, 32
    %v260 = vpop.permute.xlu0 %259
    %vm262 = vcmask 254976
    %263 = vst.msk [vmem:[#allocation3] sm:$0x3] %vm262, %v260
    %v264 = vld [vmem:[#allocation2 + $0x2] sm:$0x3]
    %v265 = vsel %vm159, %v260, 0
    %267 = vmatprep.subr.mxu0 0.0
    %268 = vmatpush1.msra.mxu0 %v153
    %269 = vmatprep.subr.mxu0 0.0
    %270 = vmatpush1.msra.mxu0 %v154
    %271 = vmatprep.subr.mxu0 0.0
    %272 = vmatpush1.msra.mxu0 %v155
    %273 = vmatprep.subr.mxu0 0.0
    %274 = vmatpush1.msra.mxu0 %v156
    %275 = vmatprep.subr.mxu0 0.0
    %276 = vmatpush1.msra.mxu0 0.0
    %277 = vmatprep.subr.mxu0 0.0
    %278 = vmatpush1.msra.mxu0 0.0
    %279 = vmatprep.subr.mxu0 0.0
    %280 = vmatpush1.msra.mxu0 0.0
    %281 = vmatprep.subr.mxu0 0.0
    %282 = vmatpush1.msra.mxu0 0.0
    %283 = vmatprep.subr.mxu0 0.0
    %284 = vmatpush1.msra.mxu0 0.0
    %285 = vmatprep.subr.mxu0 0.0
    %286 = vmatpush1.msra.mxu0 0.0
    %287 = vmatprep.subr.mxu0 0.0
    %288 = vmatpush1.msra.mxu0 0.0
    %289 = vmatprep.subr.mxu0 0.0
    %290 = vmatpush1.msra.mxu0 0.0
    %291 = vmatprep.subr.mxu0 0.0
    %292 = vmatpush1.msra.mxu0 0.0
    %293 = vmatprep.subr.mxu0 0.0
    %294 = vmatpush1.msra.mxu0 0.0
    %295 = vmatprep.subr.mxu0 0.0
    %296 = vmatpush1.msra.mxu0 0.0
    %297 = vmatprep.subr.mxu0 0.0
    %298 = vmatpush1.msra.mxu0 0.0
    %299 = vmatprep.subr.mxu0 0.0
    %300 = vmatpush1.msra.mxu0 0.0
    %301 = vmatprep.subr.mxu0 0.0
    %302 = vmatpush1.msra.mxu0 0.0
    %303 = vmatprep.subr.mxu0 0.0
    %304 = vmatpush1.msra.mxu0 0.0
    %305 = vmatprep.subr.mxu0 0.0
    %306 = vmatpush1.msra.mxu0 0.0
    %307 = vmatprep.subr.mxu0 0.0
    %308 = vmatpush1.msra.mxu0 0.0
    %309 = vmatprep.subr.mxu0 0.0
    %310 = vmatpush1.msra.mxu0 0.0
    %311 = vmatprep.subr.mxu0 0.0
    %312 = vmatpush1.msra.mxu0 0.0
    %313 = vmatprep.subr.mxu0 0.0
    %314 = vmatpush1.msra.mxu0 0.0
    %315 = vmatprep.subr.mxu0 0.0
    %316 = vmatpush1.msra.mxu0 0.0
    %317 = vmatprep.subr.mxu0 0.0
    %318 = vmatpush1.msra.mxu0 0.0
    %319 = vmatprep.subr.mxu0 0.0
    %320 = vmatpush1.msra.mxu0 0.0
    %321 = vmatprep.subr.mxu0 0.0
    %322 = vmatpush1.msra.mxu0 0.0
    %323 = vmatprep.subr.mxu0 0.0
    %324 = vmatpush1.msra.mxu0 0.0
    %325 = vmatprep.subr.mxu0 0.0
    %326 = vmatpush1.msra.mxu0 0.0
    %327 = vmatprep.subr.mxu0 0.0
    %328 = vmatpush1.msra.mxu0 0.0
    %329 = vmatprep.subr.mxu0 0.0
    %330 = vmatpush1.msra.mxu0 0.0
    %331 = vmatprep.mubr.f32.mxu0 0.0
    %332 = vmatmul.mubr.f32.gmra.mrb[0].mxu0 %v265
    %v333 = vpop.f32.mrb[0].mxu0
    %v334 = vadd.f32 0.0, %v333
    %v335 = vpop.f32.mrb[0].mxu0
    %336 = vdwg.mxu0
    %v337 = vadd.f32 %v264, %v334
    %v338 = vxor.u32 %v337, 2147483648
    %v339 = vmul.f32 %v338, 1.442695
    %v340 = vpow.pop %v339
    %v341 = vadd.f32 %v340, 1.0
    %v342 = vrcp.pop %v341
    %v343 = vmul.f32 1.0, %v342
    %v344 = vtanh.pop %v337
    %v345 = vmul.f32 %v343, %v251
    %347 = vrot.lane.b32.xlu0 %v344, 64
    %v348 = vpop.permute.xlu0 %347
    %v350 = vmul.f32 %v343, %v348
    %352 = vrot.lane.b32.xlu0 %v350, 32
    %v353 = vpop.permute.xlu0 %352
    %v355 = vadd.f32 %v345, %v353
    %v356 = vtanh.pop %v355
    %358 = vrot.lane.b32.xlu0 %v356, 64
    %v359 = vpop.permute.xlu0 %358
    %v361 = vmul.f32 %v343, %v359
    %363 = vrot.lane.b32.xlu0 %v361, 32
    %v364 = vpop.permute.xlu0 %363
    %366 = vst.msk [vmem:[#allocation3 + $0x2] sm:$0x3] %vm262, %v364
    %v367 = vld [vmem:[#allocation2 + $0x4] sm:$0x3]
    %v368 = vsel %vm159, %v364, 0
    %370 = vmatprep.subr.mxu0 0.0
    %371 = vmatpush1.msra.mxu0 %v153
    %372 = vmatprep.subr.mxu0 0.0
    %373 = vmatpush1.msra.mxu0 %v154
    %374 = vmatprep.subr.mxu0 0.0
    %375 = vmatpush1.msra.mxu0 %v155
    %376 = vmatprep.subr.mxu0 0.0
    %377 = vmatpush1.msra.mxu0 %v156
    %378 = vmatprep.subr.mxu0 0.0
    %379 = vmatpush1.msra.mxu0 0.0
    %380 = vmatprep.subr.mxu0 0.0
    %381 = vmatpush1.msra.mxu0 0.0
    %382 = vmatprep.subr.mxu0 0.0
    %383 = vmatpush1.msra.mxu0 0.0
    %384 = vmatprep.subr.mxu0 0.0
    %385 = vmatpush1.msra.mxu0 0.0
    %386 = vmatprep.subr.mxu0 0.0
    %387 = vmatpush1.msra.mxu0 0.0
    %388 = vmatprep.subr.mxu0 0.0
    %389 = vmatpush1.msra.mxu0 0.0
    %390 = vmatprep.subr.mxu0 0.0
    %391 = vmatpush1.msra.mxu0 0.0
    %392 = vmatprep.subr.mxu0 0.0
    %393 = vmatpush1.msra.mxu0 0.0
    %394 = vmatprep.subr.mxu0 0.0
    %395 = vmatpush1.msra.mxu0 0.0
    %396 = vmatprep.subr.mxu0 0.0
    %397 = vmatpush1.msra.mxu0 0.0
    %398 = vmatprep.subr.mxu0 0.0
    %399 = vmatpush1.msra.mxu0 0.0
    %400 = vmatprep.subr.mxu0 0.0
    %401 = vmatpush1.msra.mxu0 0.0
    %402 = vmatprep.subr.mxu0 0.0
    %403 = vmatpush1.msra.mxu0 0.0
    %404 = vmatprep.subr.mxu0 0.0
    %405 = vmatpush1.msra.mxu0 0.0
    %406 = vmatprep.subr.mxu0 0.0
    %407 = vmatpush1.msra.mxu0 0.0
    %408 = vmatprep.subr.mxu0 0.0
    %409 = vmatpush1.msra.mxu0 0.0
    %410 = vmatprep.subr.mxu0 0.0
    %411 = vmatpush1.msra.mxu0 0.0
    %412 = vmatprep.subr.mxu0 0.0
    %413 = vmatpush1.msra.mxu0 0.0
    %414 = vmatprep.subr.mxu0 0.0
    %415 = vmatpush1.msra.mxu0 0.0
    %416 = vmatprep.subr.mxu0 0.0
    %417 = vmatpush1.msra.mxu0 0.0
    %418 = vmatprep.subr.mxu0 0.0
    %419 = vmatpush1.msra.mxu0 0.0
    %420 = vmatprep.subr.mxu0 0.0
    %421 = vmatpush1.msra.mxu0 0.0
    %422 = vmatprep.subr.mxu0 0.0
    %423 = vmatpush1.msra.mxu0 0.0
    %424 = vmatprep.subr.mxu0 0.0
    %425 = vmatpush1.msra.mxu0 0.0
    %426 = vmatprep.subr.mxu0 0.0
    %427 = vmatpush1.msra.mxu0 0.0
    %428 = vmatprep.subr.mxu0 0.0
    %429 = vmatpush1.msra.mxu0 0.0
    %430 = vmatprep.subr.mxu0 0.0
    %431 = vmatpush1.msra.mxu0 0.0
    %432 = vmatprep.subr.mxu0 0.0
    %433 = vmatpush1.msra.mxu0 0.0
    %434 = vmatprep.mubr.f32.mxu0 0.0
    %435 = vmatmul.mubr.f32.gmra.mrb[0].mxu0 %v368
    %v436 = vpop.f32.mrb[0].mxu0
    %v437 = vadd.f32 0.0, %v436
    %v438 = vpop.f32.mrb[0].mxu0
    %439 = vdwg.mxu0
    %v440 = vadd.f32 %v367, %v437
    %v441 = vxor.u32 %v440, 2147483648
    %v442 = vmul.f32 %v441, 1.442695
    %v443 = vpow.pop %v442
    %v444 = vadd.f32 %v443, 1.0
    %v445 = vrcp.pop %v444
    %v446 = vmul.f32 1.0, %v445
    %v447 = vtanh.pop %v440
    %v448 = vmul.f32 %v446, %v355
    %450 = vrot.lane.b32.xlu0 %v447, 64
    %v451 = vpop.permute.xlu0 %450
    %v453 = vmul.f32 %v446, %v451
    %455 = vrot.lane.b32.xlu0 %v453, 32
    %v456 = vpop.permute.xlu0 %455
    %v458 = vadd.f32 %v448, %v456
    %v459 = vtanh.pop %v458
    %461 = vrot.lane.b32.xlu0 %v459, 64
    %v462 = vpop.permute.xlu0 %461
    %v464 = vmul.f32 %v446, %v462
    %466 = vrot.lane.b32.xlu0 %v464, 32
    %v467 = vpop.permute.xlu0 %466
    %469 = vst.msk [vmem:[#allocation3 + $0x4] sm:$0x3] %vm262, %v467
    %v470 = vld [vmem:[#allocation2 + $0x6] sm:$0x3]
    %v471 = vsel %vm159, %v467, 0
    %473 = vmatprep.subr.mxu0 0.0
    %474 = vmatpush1.msra.mxu0 %v153
    %475 = vmatprep.subr.mxu0 0.0
    %476 = vmatpush1.msra.mxu0 %v154
    %477 = vmatprep.subr.mxu0 0.0
    %478 = vmatpush1.msra.mxu0 %v155
    %479 = vmatprep.subr.mxu0 0.0
    %480 = vmatpush1.msra.mxu0 %v156
    %481 = vmatprep.subr.mxu0 0.0
    %482 = vmatpush1.msra.mxu0 0.0
    %483 = vmatprep.subr.mxu0 0.0
    %484 = vmatpush1.msra.mxu0 0.0
    %485 = vmatprep.subr.mxu0 0.0
    %486 = vmatpush1.msra.mxu0 0.0
    %487 = vmatprep.subr.mxu0 0.0
    %488 = vmatpush1.msra.mxu0 0.0
    %489 = vmatprep.subr.mxu0 0.0
    %490 = vmatpush1.msra.mxu0 0.0
    %491 = vmatprep.subr.mxu0 0.0
    %492 = vmatpush1.msra.mxu0 0.0
    %493 = vmatprep.subr.mxu0 0.0
    %494 = vmatpush1.msra.mxu0 0.0
    %495 = vmatprep.subr.mxu0 0.0
    %496 = vmatpush1.msra.mxu0 0.0
    %497 = vmatprep.subr.mxu0 0.0
    %498 = vmatpush1.msra.mxu0 0.0
    %499 = vmatprep.subr.mxu0 0.0
    %500 = vmatpush1.msra.mxu0 0.0
    %501 = vmatprep.subr.mxu0 0.0
    %502 = vmatpush1.msra.mxu0 0.0
    %503 = vmatprep.subr.mxu0 0.0
    %504 = vmatpush1.msra.mxu0 0.0
    %505 = vmatprep.subr.mxu0 0.0
    %506 = vmatpush1.msra.mxu0 0.0
    %507 = vmatprep.subr.mxu0 0.0
    %508 = vmatpush1.msra.mxu0 0.0
    %509 = vmatprep.subr.mxu0 0.0
    %510 = vmatpush1.msra.mxu0 0.0
    %511 = vmatprep.subr.mxu0 0.0
    %512 = vmatpush1.msra.mxu0 0.0
    %513 = vmatprep.subr.mxu0 0.0
    %514 = vmatpush1.msra.mxu0 0.0
    %515 = vmatprep.subr.mxu0 0.0
    %516 = vmatpush1.msra.mxu0 0.0
    %517 = vmatprep.subr.mxu0 0.0
    %518 = vmatpush1.msra.mxu0 0.0
    %519 = vmatprep.subr.mxu0 0.0
    %520 = vmatpush1.msra.mxu0 0.0
    %521 = vmatprep.subr.mxu0 0.0
    %522 = vmatpush1.msra.mxu0 0.0
    %523 = vmatprep.subr.mxu0 0.0
    %524 = vmatpush1.msra.mxu0 0.0
    %525 = vmatprep.subr.mxu0 0.0
    %526 = vmatpush1.msra.mxu0 0.0
    %527 = vmatprep.subr.mxu0 0.0
    %528 = vmatpush1.msra.mxu0 0.0
    %529 = vmatprep.subr.mxu0 0.0
    %530 = vmatpush1.msra.mxu0 0.0
    %531 = vmatprep.subr.mxu0 0.0
    %532 = vmatpush1.msra.mxu0 0.0
    %533 = vmatprep.subr.mxu0 0.0
    %534 = vmatpush1.msra.mxu0 0.0
    %535 = vmatprep.subr.mxu0 0.0
    %536 = vmatpush1.msra.mxu0 0.0
    %537 = vmatprep.mubr.f32.mxu0 0.0
    %538 = vmatmul.mubr.f32.gmra.mrb[0].mxu0 %v471
    %v539 = vpop.f32.mrb[0].mxu0
    %v540 = vadd.f32 0.0, %v539
    %v541 = vpop.f32.mrb[0].mxu0
    %542 = vdwg.mxu0
    %v543 = vadd.f32 %v470, %v540
    %v544 = vxor.u32 %v543, 2147483648
    %v545 = vmul.f32 %v544, 1.442695
    %v546 = vpow.pop %v545
    %v547 = vadd.f32 %v546, 1.0
    %v548 = vrcp.pop %v547
    %v549 = vmul.f32 1.0, %v548
    %v550 = vtanh.pop %v543
    %v551 = vmul.f32 %v549, %v458
    %553 = vrot.lane.b32.xlu0 %v550, 64
    %v554 = vpop.permute.xlu0 %553
    %v556 = vmul.f32 %v549, %v554
    %558 = vrot.lane.b32.xlu0 %v556, 32
    %v559 = vpop.permute.xlu0 %558
    %v561 = vadd.f32 %v551, %v559
    %v562 = vtanh.pop %v561
    %564 = vrot.lane.b32.xlu0 %v562, 64
    %v565 = vpop.permute.xlu0 %564
    %v567 = vmul.f32 %v549, %v565
    %569 = vrot.lane.b32.xlu0 %v567, 32
    %v570 = vpop.permute.xlu0 %569
    %572 = vst.msk [vmem:[#allocation3 + $0x6] sm:$0x3] %vm262, %v570
    %v573 = vld [vmem:[#allocation2 + $0x8] sm:$0x3]
    %v574 = vsel %vm159, %v570, 0
    %576 = vmatprep.subr.mxu0 0.0
    %577 = vmatpush1.msra.mxu0 %v153
    %578 = vmatprep.subr.mxu0 0.0
    %579 = vmatpush1.msra.mxu0 %v154
    %580 = vmatprep.subr.mxu0 0.0
    %581 = vmatpush1.msra.mxu0 %v155
    %582 = vmatprep.subr.mxu0 0.0
    %583 = vmatpush1.msra.mxu0 %v156
    %584 = vmatprep.subr.mxu0 0.0
    %585 = vmatpush1.msra.mxu0 0.0
    %586 = vmatprep.subr.mxu0 0.0
    %587 = vmatpush1.msra.mxu0 0.0
    %588 = vmatprep.subr.mxu0 0.0
    %589 = vmatpush1.msra.mxu0 0.0
    %590 = vmatprep.subr.mxu0 0.0
    %591 = vmatpush1.msra.mxu0 0.0
    %592 = vmatprep.subr.mxu0 0.0
    %593 = vmatpush1.msra.mxu0 0.0
    %594 = vmatprep.subr.mxu0 0.0
    %595 = vmatpush1.msra.mxu0 0.0
    %596 = vmatprep.subr.mxu0 0.0
    %597 = vmatpush1.msra.mxu0 0.0
    %598 = vmatprep.subr.mxu0 0.0
    %599 = vmatpush1.msra.mxu0 0.0
    %600 = vmatprep.subr.mxu0 0.0
    %601 = vmatpush1.msra.mxu0 0.0
    %602 = vmatprep.subr.mxu0 0.0
    %603 = vmatpush1.msra.mxu0 0.0
    %604 = vmatprep.subr.mxu0 0.0
    %605 = vmatpush1.msra.mxu0 0.0
    %606 = vmatprep.subr.mxu0 0.0
    %607 = vmatpush1.msra.mxu0 0.0
    %608 = vmatprep.subr.mxu0 0.0
    %609 = vmatpush1.msra.mxu0 0.0
    %610 = vmatprep.subr.mxu0 0.0
    %611 = vmatpush1.msra.mxu0 0.0
    %612 = vmatprep.subr.mxu0 0.0
    %613 = vmatpush1.msra.mxu0 0.0
    %614 = vmatprep.subr.mxu0 0.0
    %615 = vmatpush1.msra.mxu0 0.0
    %616 = vmatprep.subr.mxu0 0.0
    %617 = vmatpush1.msra.mxu0 0.0
    %618 = vmatprep.subr.mxu0 0.0
    %619 = vmatpush1.msra.mxu0 0.0
    %620 = vmatprep.subr.mxu0 0.0
    %621 = vmatpush1.msra.mxu0 0.0
    %622 = vmatprep.subr.mxu0 0.0
    %623 = vmatpush1.msra.mxu0 0.0
    %624 = vmatprep.subr.mxu0 0.0
    %625 = vmatpush1.msra.mxu0 0.0
    %626 = vmatprep.subr.mxu0 0.0
    %627 = vmatpush1.msra.mxu0 0.0
    %628 = vmatprep.subr.mxu0 0.0
    %629 = vmatpush1.msra.mxu0 0.0
    %630 = vmatprep.subr.mxu0 0.0
    %631 = vmatpush1.msra.mxu0 0.0
    %632 = vmatprep.subr.mxu0 0.0
    %633 = vmatpush1.msra.mxu0 0.0
    %634 = vmatprep.subr.mxu0 0.0
    %635 = vmatpush1.msra.mxu0 0.0
    %636 = vmatprep.subr.mxu0 0.0
    %637 = vmatpush1.msra.mxu0 0.0
    %638 = vmatprep.subr.mxu0 0.0
    %639 = vmatpush1.msra.mxu0 0.0
    %640 = vmatprep.mubr.f32.mxu0 0.0
    %641 = vmatmul.mubr.f32.gmra.mrb[0].mxu0 %v574
    %v642 = vpop.f32.mrb[0].mxu0
    %v643 = vadd.f32 0.0, %v642
    %v644 = vpop.f32.mrb[0].mxu0
    %645 = vdwg.mxu0
    %v646 = vadd.f32 %v573, %v643
    %v647 = vxor.u32 %v646, 2147483648
    %v648 = vmul.f32 %v647, 1.442695
    %v649 = vpow.pop %v648
    %v650 = vadd.f32 %v649, 1.0
    %v651 = vrcp.pop %v650
    %v652 = vmul.f32 1.0, %v651
    %v653 = vtanh.pop %v646
    %v654 = vmul.f32 %v652, %v561
    %656 = vrot.lane.b32.xlu0 %v653, 64
    %v657 = vpop.permute.xlu0 %656
    %v659 = vmul.f32 %v652, %v657
    %661 = vrot.lane.b32.xlu0 %v659, 32
    %v662 = vpop.permute.xlu0 %661
    %v664 = vadd.f32 %v654, %v662
    %v665 = vtanh.pop %v664
    %667 = vrot.lane.b32.xlu0 %v665, 64
    %v668 = vpop.permute.xlu0 %667
    %v670 = vmul.f32 %v652, %v668
    %672 = vrot.lane.b32.xlu0 %v670, 32
    %v673 = vpop.permute.xlu0 %672
    %675 = vst.msk [vmem:[#allocation3 + $0x8] sm:$0x3] %vm262, %v673
    %v676 = vld [vmem:[#allocation2 + $0xa] sm:$0x3]
    %v677 = vsel %vm159, %v673, 0
    %679 = vmatprep.subr.mxu0 0.0
    %680 = vmatpush1.msra.mxu0 %v153
    %681 = vmatprep.subr.mxu0 0.0
    %682 = vmatpush1.msra.mxu0 %v154
    %683 = vmatprep.subr.mxu0 0.0
    %684 = vmatpush1.msra.mxu0 %v155
    %685 = vmatprep.subr.mxu0 0.0
    %686 = vmatpush1.msra.mxu0 %v156
    %687 = vmatprep.subr.mxu0 0.0
    %688 = vmatpush1.msra.mxu0 0.0
    %689 = vmatprep.subr.mxu0 0.0
    %690 = vmatpush1.msra.mxu0 0.0
    %691 = vmatprep.subr.mxu0 0.0
    %692 = vmatpush1.msra.mxu0 0.0
    %693 = vmatprep.subr.mxu0 0.0
    %694 = vmatpush1.msra.mxu0 0.0
    %695 = vmatprep.subr.mxu0 0.0
    %696 = vmatpush1.msra.mxu0 0.0
    %697 = vmatprep.subr.mxu0 0.0
    %698 = vmatpush1.msra.mxu0 0.0
    %699 = vmatprep.subr.mxu0 0.0
    %700 = vmatpush1.msra.mxu0 0.0
    %701 = vmatprep.subr.mxu0 0.0
    %702 = vmatpush1.msra.mxu0 0.0
    %703 = vmatprep.subr.mxu0 0.0
    %704 = vmatpush1.msra.mxu0 0.0
    %705 = vmatprep.subr.mxu0 0.0
    %706 = vmatpush1.msra.mxu0 0.0
    %707 = vmatprep.subr.mxu0 0.0
    %708 = vmatpush1.msra.mxu0 0.0
    %709 = vmatprep.subr.mxu0 0.0
    %710 = vmatpush1.msra.mxu0 0.0
    %711 = vmatprep.subr.mxu0 0.0
    %712 = vmatpush1.msra.mxu0 0.0
    %713 = vmatprep.subr.mxu0 0.0
    %714 = vmatpush1.msra.mxu0 0.0
    %715 = vmatprep.subr.mxu0 0.0
    %716 = vmatpush1.msra.mxu0 0.0
    %717 = vmatprep.subr.mxu0 0.0
    %718 = vmatpush1.msra.mxu0 0.0
    %719 = vmatprep.subr.mxu0 0.0
    %720 = vmatpush1.msra.mxu0 0.0
    %721 = vmatprep.subr.mxu0 0.0
    %722 = vmatpush1.msra.mxu0 0.0
    %723 = vmatprep.subr.mxu0 0.0
    %724 = vmatpush1.msra.mxu0 0.0
    %725 = vmatprep.subr.mxu0 0.0
    %726 = vmatpush1.msra.mxu0 0.0
    %727 = vmatprep.subr.mxu0 0.0
    %728 = vmatpush1.msra.mxu0 0.0
    %729 = vmatprep.subr.mxu0 0.0
    %730 = vmatpush1.msra.mxu0 0.0
    %731 = vmatprep.subr.mxu0 0.0
    %732 = vmatpush1.msra.mxu0 0.0
    %733 = vmatprep.subr.mxu0 0.0
    %734 = vmatpush1.msra.mxu0 0.0
    %735 = vmatprep.subr.mxu0 0.0
    %736 = vmatpush1.msra.mxu0 0.0
    %737 = vmatprep.subr.mxu0 0.0
    %738 = vmatpush1.msra.mxu0 0.0
    %739 = vmatprep.subr.mxu0 0.0
    %740 = vmatpush1.msra.mxu0 0.0
    %741 = vmatprep.subr.mxu0 0.0
    %742 = vmatpush1.msra.mxu0 0.0
    %743 = vmatprep.mubr.f32.mxu0 0.0
    %744 = vmatmul.mubr.f32.gmra.mrb[0].mxu0 %v677
    %v745 = vpop.f32.mrb[0].mxu0
    %v746 = vadd.f32 0.0, %v745
    %v747 = vpop.f32.mrb[0].mxu0
    %748 = vdwg.mxu0
    %v749 = vadd.f32 %v676, %v746
    %v750 = vxor.u32 %v749, 2147483648
    %v751 = vmul.f32 %v750, 1.442695
    %v752 = vpow.pop %v751
    %v753 = vadd.f32 %v752, 1.0
    %v754 = vrcp.pop %v753
    %v755 = vmul.f32 1.0, %v754
    %v756 = vtanh.pop %v749
    %v757 = vmul.f32 %v755, %v664
    %759 = vrot.lane.b32.xlu0 %v756, 64
    %v760 = vpop.permute.xlu0 %759
    %v762 = vmul.f32 %v755, %v760
    %764 = vrot.lane.b32.xlu0 %v762, 32
    %v765 = vpop.permute.xlu0 %764
    %v767 = vadd.f32 %v757, %v765
    %v768 = vtanh.pop %v767
    %770 = vrot.lane.b32.xlu0 %v768, 64
    %v771 = vpop.permute.xlu0 %770
    %v773 = vmul.f32 %v755, %v771
    %775 = vrot.lane.b32.xlu0 %v773, 32
    %v776 = vpop.permute.xlu0 %775
    %778 = vst.msk [vmem:[#allocation3 + $0xa] sm:$0x3] %vm262, %v776
    %v779 = vld [vmem:[#allocation2 + $0xc] sm:$0x3]
    %v780 = vsel %vm159, %v776, 0
    %782 = vmatprep.subr.mxu0 0.0
    %783 = vmatpush1.msra.mxu0 %v153
    %784 = vmatprep.subr.mxu0 0.0
    %785 = vmatpush1.msra.mxu0 %v154
    %786 = vmatprep.subr.mxu0 0.0
    %787 = vmatpush1.msra.mxu0 %v155
    %788 = vmatprep.subr.mxu0 0.0
    %789 = vmatpush1.msra.mxu0 %v156
    %790 = vmatprep.subr.mxu0 0.0
    %791 = vmatpush1.msra.mxu0 0.0
    %792 = vmatprep.subr.mxu0 0.0
    %793 = vmatpush1.msra.mxu0 0.0
    %794 = vmatprep.subr.mxu0 0.0
    %795 = vmatpush1.msra.mxu0 0.0
    %796 = vmatprep.subr.mxu0 0.0
    %797 = vmatpush1.msra.mxu0 0.0
    %798 = vmatprep.subr.mxu0 0.0
    %799 = vmatpush1.msra.mxu0 0.0
    %800 = vmatprep.subr.mxu0 0.0
    %801 = vmatpush1.msra.mxu0 0.0
    %802 = vmatprep.subr.mxu0 0.0
    %803 = vmatpush1.msra.mxu0 0.0
    %804 = vmatprep.subr.mxu0 0.0
    %805 = vmatpush1.msra.mxu0 0.0
    %806 = vmatprep.subr.mxu0 0.0
    %807 = vmatpush1.msra.mxu0 0.0
    %808 = vmatprep.subr.mxu0 0.0
    %809 = vmatpush1.msra.mxu0 0.0
    %810 = vmatprep.subr.mxu0 0.0
    %811 = vmatpush1.msra.mxu0 0.0
    %812 = vmatprep.subr.mxu0 0.0
    %813 = vmatpush1.msra.mxu0 0.0
    %814 = vmatprep.subr.mxu0 0.0
    %815 = vmatpush1.msra.mxu0 0.0
    %816 = vmatprep.subr.mxu0 0.0
    %817 = vmatpush1.msra.mxu0 0.0
    %818 = vmatprep.subr.mxu0 0.0
    %819 = vmatpush1.msra.mxu0 0.0
    %820 = vmatprep.subr.mxu0 0.0
    %821 = vmatpush1.msra.mxu0 0.0
    %822 = vmatprep.subr.mxu0 0.0
    %823 = vmatpush1.msra.mxu0 0.0
    %824 = vmatprep.subr.mxu0 0.0
    %825 = vmatpush1.msra.mxu0 0.0
    %826 = vmatprep.subr.mxu0 0.0
    %827 = vmatpush1.msra.mxu0 0.0
    %828 = vmatprep.subr.mxu0 0.0
    %829 = vmatpush1.msra.mxu0 0.0
    %830 = vmatprep.subr.mxu0 0.0
    %831 = vmatpush1.msra.mxu0 0.0
    %832 = vmatprep.subr.mxu0 0.0
    %833 = vmatpush1.msra.mxu0 0.0
    %834 = vmatprep.subr.mxu0 0.0
    %835 = vmatpush1.msra.mxu0 0.0
    %836 = vmatprep.subr.mxu0 0.0
    %837 = vmatpush1.msra.mxu0 0.0
    %838 = vmatprep.subr.mxu0 0.0
    %839 = vmatpush1.msra.mxu0 0.0
    %840 = vmatprep.subr.mxu0 0.0
    %841 = vmatpush1.msra.mxu0 0.0
    %842 = vmatprep.subr.mxu0 0.0
    %843 = vmatpush1.msra.mxu0 0.0
    %844 = vmatprep.subr.mxu0 0.0
    %845 = vmatpush1.msra.mxu0 0.0
    %846 = vmatprep.mubr.f32.mxu0 0.0
    %847 = vmatmul.mubr.f32.gmra.mrb[0].mxu0 %v780
    %v848 = vpop.f32.mrb[0].mxu0
    %v849 = vadd.f32 0.0, %v848
    %v850 = vpop.f32.mrb[0].mxu0
    %851 = vdwg.mxu0
    %v852 = vadd.f32 %v779, %v849
    %v853 = vxor.u32 %v852, 2147483648
    %v854 = vmul.f32 %v853, 1.442695
    %v855 = vpow.pop %v854
    %v856 = vadd.f32 %v855, 1.0
    %v857 = vrcp.pop %v856
    %v858 = vmul.f32 1.0, %v857
    %v859 = vtanh.pop %v852
    %v860 = vmul.f32 %v858, %v767
    %862 = vrot.lane.b32.xlu0 %v859, 64
    %v863 = vpop.permute.xlu0 %862
    %v865 = vmul.f32 %v858, %v863
    %867 = vrot.lane.b32.xlu0 %v865, 32
    %v868 = vpop.permute.xlu0 %867
    %v870 = vadd.f32 %v860, %v868
    %v871 = vtanh.pop %v870
    %873 = vrot.lane.b32.xlu0 %v871, 64
    %v874 = vpop.permute.xlu0 %873
    %v876 = vmul.f32 %v858, %v874
    %878 = vrot.lane.b32.xlu0 %v876, 32
    %v879 = vpop.permute.xlu0 %878
    %881 = vst.msk [vmem:[#allocation3 + $0xc] sm:$0x3] %vm262, %v879
    %v882 = vld [vmem:[#allocation2 + $0xe] sm:$0x3]
    %v883 = vsel %vm159, %v879, 0
    %885 = vmatprep.subr.mxu0 0.0
    %886 = vmatpush1.msra.mxu0 %v153
    %887 = vmatprep.subr.mxu0 0.0
    %888 = vmatpush1.msra.mxu0 %v154
    %889 = vmatprep.subr.mxu0 0.0
    %890 = vmatpush1.msra.mxu0 %v155
    %891 = vmatprep.subr.mxu0 0.0
    %892 = vmatpush1.msra.mxu0 %v156
    %893 = vmatprep.subr.mxu0 0.0
    %894 = vmatpush1.msra.mxu0 0.0
    %895 = vmatprep.subr.mxu0 0.0
    %896 = vmatpush1.msra.mxu0 0.0
    %897 = vmatprep.subr.mxu0 0.0
    %898 = vmatpush1.msra.mxu0 0.0
    %899 = vmatprep.subr.mxu0 0.0
    %900 = vmatpush1.msra.mxu0 0.0
    %901 = vmatprep.subr.mxu0 0.0
    %902 = vmatpush1.msra.mxu0 0.0
    %903 = vmatprep.subr.mxu0 0.0
    %904 = vmatpush1.msra.mxu0 0.0
    %905 = vmatprep.subr.mxu0 0.0
    %906 = vmatpush1.msra.mxu0 0.0
    %907 = vmatprep.subr.mxu0 0.0
    %908 = vmatpush1.msra.mxu0 0.0
    %909 = vmatprep.subr.mxu0 0.0
    %910 = vmatpush1.msra.mxu0 0.0
    %911 = vmatprep.subr.mxu0 0.0
    %912 = vmatpush1.msra.mxu0 0.0
    %913 = vmatprep.subr.mxu0 0.0
    %914 = vmatpush1.msra.mxu0 0.0
    %915 = vmatprep.subr.mxu0 0.0
    %916 = vmatpush1.msra.mxu0 0.0
    %917 = vmatprep.subr.mxu0 0.0
    %918 = vmatpush1.msra.mxu0 0.0
    %919 = vmatprep.subr.mxu0 0.0
    %920 = vmatpush1.msra.mxu0 0.0
    %921 = vmatprep.subr.mxu0 0.0
    %922 = vmatpush1.msra.mxu0 0.0
    %923 = vmatprep.subr.mxu0 0.0
    %924 = vmatpush1.msra.mxu0 0.0
    %925 = vmatprep.subr.mxu0 0.0
    %926 = vmatpush1.msra.mxu0 0.0
    %927 = vmatprep.subr.mxu0 0.0
    %928 = vmatpush1.msra.mxu0 0.0
    %929 = vmatprep.subr.mxu0 0.0
    %930 = vmatpush1.msra.mxu0 0.0
    %931 = vmatprep.subr.mxu0 0.0
    %932 = vmatpush1.msra.mxu0 0.0
    %933 = vmatprep.subr.mxu0 0.0
    %934 = vmatpush1.msra.mxu0 0.0
    %935 = vmatprep.subr.mxu0 0.0
    %936 = vmatpush1.msra.mxu0 0.0
    %937 = vmatprep.subr.mxu0 0.0
    %938 = vmatpush1.msra.mxu0 0.0
    %939 = vmatprep.subr.mxu0 0.0
    %940 = vmatpush1.msra.mxu0 0.0
    %941 = vmatprep.subr.mxu0 0.0
    %942 = vmatpush1.msra.mxu0 0.0
    %943 = vmatprep.subr.mxu0 0.0
    %944 = vmatpush1.msra.mxu0 0.0
    %945 = vmatprep.subr.mxu0 0.0
    %946 = vmatpush1.msra.mxu0 0.0
    %947 = vmatprep.subr.mxu0 0.0
    %948 = vmatpush1.msra.mxu0 0.0
    %949 = vmatprep.mubr.f32.mxu0 0.0
    %950 = vmatmul.mubr.f32.gmra.mrb[0].mxu0 %v883
    %v951 = vpop.f32.mrb[0].mxu0
    %v952 = vadd.f32 0.0, %v951
    %v953 = vpop.f32.mrb[0].mxu0
    %954 = vdwg.mxu0
    %v955 = vadd.f32 %v882, %v952
    %v956 = vxor.u32 %v955, 2147483648
    %v957 = vmul.f32 %v956, 1.442695
    %v958 = vpow.pop %v957
    %v959 = vadd.f32 %v958, 1.0
    %v960 = vrcp.pop %v959
    %v961 = vmul.f32 1.0, %v960
    %v962 = vtanh.pop %v955
    %v963 = vmul.f32 %v961, %v870
    %965 = vrot.lane.b32.xlu0 %v962, 64
    %v966 = vpop.permute.xlu0 %965
    %v968 = vmul.f32 %v961, %v966
    %970 = vrot.lane.b32.xlu0 %v968, 32
    %v971 = vpop.permute.xlu0 %970
    %v973 = vadd.f32 %v963, %v971
    %v974 = vtanh.pop %v973
    %976 = vrot.lane.b32.xlu0 %v974, 64
    %v977 = vpop.permute.xlu0 %976
    %v979 = vmul.f32 %v961, %v977
    %981 = vrot.lane.b32.xlu0 %v979, 32
    %v982 = vpop.permute.xlu0 %981
    %984 = vst.msk [vmem:[#allocation3 + $0xe] sm:$0x3] %vm262, %v982
    %v985 = vld [vmem:[#allocation3] sm:$0xff]
    %v986 = vld [vmem:[#allocation3 + $0x8] sm:$0xff]
    %v987 = vld [vmem:[#allocation4] sm:$0xff]
    %v988 = vld [vmem:[#allocation4 + $0x8] sm:$0xff]
    %v989 = vld [vmem:[#allocation4 + $0x10] sm:$0xff]
    %v990 = vld [vmem:[#allocation4 + $0x18] sm:$0xff]
    %v991 = vld [vmem:[%s6] sm:$0x1]
    %v993 = vlaneseq
    %v994 = vshrl.u32 %v993, 7
    %v995 = vsub.s32 0, %v994
    %v996 = vrot.slane %v991, %v995
    %v999 = vsel %vm159, %v985, 0
    %v1002 = vsel %vm159, %v986, 0
    %1004 = vmatprep.subr.mxu0 0.0
    %1005 = vmatpush1.msra.mxu0 %v987
    %1006 = vmatprep.subr.mxu0 0.0
    %1007 = vmatpush1.msra.mxu0 %v988
    %1008 = vmatprep.subr.mxu0 0.0
    %1009 = vmatpush1.msra.mxu0 %v989
    %1010 = vmatprep.subr.mxu0 0.0
    %1011 = vmatpush1.msra.mxu0 %v990
    %1012 = vmatprep.subr.mxu0 0.0
    %1013 = vmatpush1.msra.mxu0 0.0
    %1014 = vmatprep.subr.mxu0 0.0
    %1015 = vmatpush1.msra.mxu0 0.0
    %1016 = vmatprep.subr.mxu0 0.0
    %1017 = vmatpush1.msra.mxu0 0.0
    %1018 = vmatprep.subr.mxu0 0.0
    %1019 = vmatpush1.msra.mxu0 0.0
    %1020 = vmatprep.subr.mxu0 0.0
    %1021 = vmatpush1.msra.mxu0 0.0
    %1022 = vmatprep.subr.mxu0 0.0
    %1023 = vmatpush1.msra.mxu0 0.0
    %1024 = vmatprep.subr.mxu0 0.0
    %1025 = vmatpush1.msra.mxu0 0.0
    %1026 = vmatprep.subr.mxu0 0.0
    %1027 = vmatpush1.msra.mxu0 0.0
    %1028 = vmatprep.subr.mxu0 0.0
    %1029 = vmatpush1.msra.mxu0 0.0
    %1030 = vmatprep.subr.mxu0 0.0
    %1031 = vmatpush1.msra.mxu0 0.0
    %1032 = vmatprep.subr.mxu0 0.0
    %1033 = vmatpush1.msra.mxu0 0.0
    %1034 = vmatprep.subr.mxu0 0.0
    %1035 = vmatpush1.msra.mxu0 0.0
    %1036 = vmatprep.subr.mxu0 0.0
    %1037 = vmatpush1.msra.mxu0 0.0
    %1038 = vmatprep.subr.mxu0 0.0
    %1039 = vmatpush1.msra.mxu0 0.0
    %1040 = vmatprep.subr.mxu0 0.0
    %1041 = vmatpush1.msra.mxu0 0.0
    %1042 = vmatprep.subr.mxu0 0.0
    %1043 = vmatpush1.msra.mxu0 0.0
    %1044 = vmatprep.subr.mxu0 0.0
    %1045 = vmatpush1.msra.mxu0 0.0
    %1046 = vmatprep.subr.mxu0 0.0
    %1047 = vmatpush1.msra.mxu0 0.0
    %1048 = vmatprep.subr.mxu0 0.0
    %1049 = vmatpush1.msra.mxu0 0.0
    %1050 = vmatprep.subr.mxu0 0.0
    %1051 = vmatpush1.msra.mxu0 0.0
    %1052 = vmatprep.subr.mxu0 0.0
    %1053 = vmatpush1.msra.mxu0 0.0
    %1054 = vmatprep.subr.mxu0 0.0
    %1055 = vmatpush1.msra.mxu0 0.0
    %1056 = vmatprep.subr.mxu0 0.0
    %1057 = vmatpush1.msra.mxu0 0.0
    %1058 = vmatprep.subr.mxu0 0.0
    %1059 = vmatpush1.msra.mxu0 0.0
    %1060 = vmatprep.subr.mxu0 0.0
    %1061 = vmatpush1.msra.mxu0 0.0
    %1062 = vmatprep.subr.mxu0 0.0
    %1063 = vmatpush1.msra.mxu0 0.0
    %1064 = vmatprep.subr.mxu0 0.0
    %1065 = vmatpush1.msra.mxu0 0.0
    %1066 = vmatprep.subr.mxu0 0.0
    %1067 = vmatpush1.msra.mxu0 0.0
    %1068 = vmatprep.mubr.f32.mxu0 0.0
    %1069 = vmatmul.mubr.f32.gmra.mrb[0].mxu0 %v999
    %v1070 = vpop.f32.mrb[0].mxu0
    %v1071 = vadd.f32 %v996, %v1070
    %v1072 = vpop.f32.mrb[0].mxu0
    %1073 = vmatprep.mubr.f32.mxu0 0.0
    %1074 = vmatmul.mubr.f32.gmra.mrb[0].mxu0 %v1002
    %v1075 = vpop.f32.mrb[0].mxu0
    %v1076 = vadd.f32 %v996, %v1075
    %v1077 = vpop.f32.mrb[0].mxu0
    %1078 = vdwg.mxu0
    %1079 = vst [vmem:[#allocation7] sm:$0xff] %v1071
    %1080 = vst [vmem:[#allocation7 + $0x8] sm:$0xff] %v1076
    %1081 = vst.msk [vmem:[#allocation8] sm:$0x3] %vm262, %v982
    // Predicated region
    $region34: #{step_selector_decoder_forward.1} parent=1 // pred_check
      _
    $region35: #{step_selector_decoder_forward.1} parent=1 // pred_check_branch
      %1083 = sbr.rel (0) target = $region37
    $region36: #{step_selector_decoder_forward.1} parent=1 // pred_region
      %s1085 = ssub.s32 256, 256
      %1086 = vsyncadd [#allocation6], %s1085
      %s1087 = sshll.u32 [#allocation7], 4
      %s1088 = int_to_ptr.vmem [resolvable:$true] %s1087
      %1093 = dma.vmem_to_hbm [thread:$0]  %s1088, 256, %s7, [#allocation6], 128, 128, 8
    $region37: #{step_selector_decoder_forward.1} parent=1 // pred_fallthru
      _
    // Predicated region
    $region38: #{step_selector_decoder_forward.1} parent=1 // pred_check
      _
    $region39: #{step_selector_decoder_forward.1} parent=1 // pred_check_branch
      %1095 = sbr.rel (0) target = $region41
    $region40: #{step_selector_decoder_forward.1} parent=1 // pred_region
      %s1097 = ssub.s32 32, 32
      %1098 = vsyncadd [#allocation9], %s1097
      %s1100 = sshll.u32 [#allocation8], 4
      %s1101 = int_to_ptr.vmem [resolvable:$true] %s1100
      %1103 = dma.vmem_to_hbm [thread:$0]  %s1101, 32, %s8, [#allocation9]
    $region41: #{step_selector_decoder_forward.1} parent=1 // pred_fallthru
      _
    // Predicated region
    $region42: #{step_selector_decoder_forward.1} parent=1 // pred_check
      _
    $region43: #{step_selector_decoder_forward.1} parent=1 // pred_check_branch
      %1105 = sbr.rel (0) target = $region45
    $region44: #{step_selector_decoder_forward.1} parent=1 // pred_region
      %1106 = dma.done [#allocation6], 256
    $region45: #{step_selector_decoder_forward.1} parent=1 // pred_fallthru
      _
    // Predicated region
    $region46: #{step_selector_decoder_forward.1} parent=1 // pred_check
      _
    $region47: #{step_selector_decoder_forward.1} parent=1 // pred_check_branch
      %1108 = sbr.rel (0) target = $region49
    $region48: #{step_selector_decoder_forward.1} parent=1 // pred_region
      %1109 = dma.done [#allocation9], 32
    $region49: #{step_selector_decoder_forward.1} parent=1 // pred_fallthru
      _
    %1110 = vsyncpa [#allocation5], 1
    %1111 = vsyncpa [#allocation6], 1
    %1112 = vsyncpa [#allocation9], 1

</llo_original>
